<compile_context>
chip_gen: v5e
topology: v5e:2x2
jax: 0.10.0
libtpu: 0.0.40
codegen_flags: <defaults>
</compile_context>

<pallas_src>
import numpy as np
import jax
import jax.numpy as jnp
from jax.experimental import pallas as pl
from jax.experimental.pallas import tpu as pltpu


# -----------------------------------------------------------------------------
# Fused forward kernel: one batch tile (BT elements) per grid step.
# In-kernel layout: spatial positions on sublanes, channels on lanes.
# -----------------------------------------------------------------------------
def fused_kernel(x_ref, w1, b1, w2, b2, w3, b3,
                 se1, so1, se2, so2, se3, so3,
                 hw1, hb1, hw2, hb2, hw3, hb3, o_ref):
    bt = x_ref.shape[0]
    xall = x_ref[...]                          # (BT, L, Cin)
    ys = [xall[b] for b in range(bt)]          # each (L, Cin)

    # Layer-major loop: per-layer constants loaded once, reused for all BT.
    for w_ref, b_ref, se_ref, so_ref in ((w1, b1, se1, so1),
                                         (w2, b2, se2, so2),
                                         (w3, b3, se3, so3)):
        w = w_ref[...]            # (K*Cin, Cout), row order (k, c)
        bias = b_ref[...]         # (1, Cout)
        se = se_ref[...]          # (PL, OL) 0/1 selector of even rows
        so = so_ref[...]          # (PL, OL) 0/1 selector of odd rows
        cin = ys[0].shape[1]
        k_taps = w.shape[0] // cin
        ol = se.shape[1]
        for b in range(bt):
            x_lc = ys[b]
            # im2col with a single concat; column order (k, c) matches w.
            patch = jnp.concatenate(
                [x_lc[k:k + ol, :] for k in range(k_taps)], axis=1)  # (OL, K*Cin)
            y = jnp.dot(patch, w, preferred_element_type=jnp.float32) + bias
            y = jnp.maximum(y, 0.0)                                  # (OL, Cout)
            # MaxPool1d(2, 2), floor semantics: two selection matmuls + max.
            ys[b] = jnp.maximum(
                jnp.dot(se, y, preferred_element_type=jnp.float32),
                jnp.dot(so, y, preferred_element_type=jnp.float32))  # (PL, Cout)

    # Flatten each element to (1, L3*C3) in (l, c) order (head layer-1 weight
    # rows were permuted on the host to match torch's channel-major view),
    # then stack the tile so the 3 packed head layers run as 3 matmuls total.
    l3 = ys[0].shape[0]
    flats = [jnp.concatenate([ys[b][l:l + 1, :] for l in range(l3)], axis=1)
             for b in range(bt)]
    flat = flats[0] if bt == 1 else jnp.concatenate(flats, axis=0)   # (BT, F)

    h = jnp.maximum(jnp.dot(flat, hw1[...],
                            preferred_element_type=jnp.float32) + hb1[...], 0.0)
    h = jnp.maximum(jnp.dot(h, hw2[...],
                            preferred_element_type=jnp.float32) + hb2[...], 0.0)
    o_ref[...] = jnp.dot(h, hw3[...],
                         preferred_element_type=jnp.float32) + hb3[...]   # (BT, 6)


# -----------------------------------------------------------------------------
# Host-side packing + pallas_call wrapper.
# -----------------------------------------------------------------------------
def _conv_slab(w):
    # torch Conv1d weight (Cout, Cin, K) -> (K*Cin, Cout), row order (k, c).
    cout, cin, k = w.shape
    return jnp.transpose(w, (2, 1, 0)).reshape(k * cin, cout)


def _pool_selectors(ol):
    pool_l = ol // 2
    rows = np.arange(pool_l)[:, None]
    cols = np.arange(ol)[None, :]
    se = (cols == 2 * rows).astype(np.float32)
    so = (cols == 2 * rows + 1).astype(np.float32)
    return jnp.asarray(se), jnp.asarray(so)


def flow_reg_clf_forward(x_ncl, params, batch_tile=8):
    B, cin, L = x_ncl.shape
    ol1 = L - 16 + 1; l1 = ol1 // 2
    ol2 = l1 - 8 + 1; l2 = ol2 // 2
    ol3 = l2 - 5 + 1; l3 = ol3 // 2
    c3 = params["conv3_w"].shape[0]
    flatten_len = c3 * l3
    hdim = params["classify1_w"].shape[1]          # 64
    names = ("classify", "vel", "len")
    dout = 4 + 1 + 1

    # Batch tile: whole batch in one step when small; otherwise 8-row tiles so
    # the output block's leading dim stays 8-aligned when the grid has >1 step.
    bt = B if B <= batch_tile else 8
    b_pad = -(-B // bt) * bt

    # One cheap XLA transpose at the boundary: (B, C, L) -> (B, L, C).
    x_lc = jnp.transpose(x_ncl, (0, 2, 1)).astype(jnp.float32)
    if b_pad != B:
        x_lc = jnp.pad(x_lc, ((0, b_pad - B), (0, 0), (0, 0)))

    w1, b1 = _conv_slab(params["conv1_w"]), params["conv1_b"].reshape(1, -1)
    w2, b2 = _conv_slab(params["conv2_w"]), params["conv2_b"].reshape(1, -1)
    w3, b3 = _conv_slab(params["conv3_w"]), params["conv3_b"].reshape(1, -1)
    se1, so1 = _pool_selectors(ol1)
    se2, so2 = _pool_selectors(ol2)
    se3, so3 = _pool_selectors(ol3)

    # Head layer 1: permute rows from torch flatten order t = c*l3 + l to the
    # kernel's order j = l*c3 + c, then concatenate the three heads.
    def perm_w1(w):
        return w.reshape(c3, l3, hdim).transpose(1, 0, 2).reshape(flatten_len, hdim)

    hw1 = jnp.concatenate([perm_w1(params[f"{n}1_w"]) for n in names], axis=1)
    hb1 = jnp.concatenate([params[f"{n}1_b"] for n in names]).reshape(1, -1)

    # Head layer 2: block-diagonal (192, 192).
    hw2 = jnp.zeros((3 * hdim, 3 * hdim), jnp.float32)
    for i, n in enumerate(names):
        hw2 = hw2.at[i * hdim:(i + 1) * hdim,
                     i * hdim:(i + 1) * hdim].set(params[f"{n}2_w"])
    hb2 = jnp.concatenate([params[f"{n}2_b"] for n in names]).reshape(1, -1)

    # Head layer 3: block-packed (192, 6): cols 0:4 classify, 4 vel, 5 len.
    hw3 = jnp.zeros((3 * hdim, dout), jnp.float32)
    col = 0
    for i, n in enumerate(names):
        d = params[f"{n}3_w"].shape[1]
        hw3 = hw3.at[i * hdim:(i + 1) * hdim, col:col + d].set(params[f"{n}3_w"])
        col += d
    hb3 = jnp.concatenate([params[f"{n}3_b"] for n in names]).reshape(1, -1)

    def full_spec(a):
        nd = a.ndim
        return pl.BlockSpec(a.shape, lambda *_, nd=nd: (0,) * nd)

    consts = (w1, b1, w2, b2, w3, b3, se1, so1, se2, so2, se3, so3,
              hw1, hb1, hw2, hb2, hw3, hb3)

    out = pl.pallas_call(
        fused_kernel,
        out_shape=jax.ShapeDtypeStruct((b_pad, dout), jnp.float32),
        grid=(b_pad // bt,),
        in_specs=[pl.BlockSpec((bt, L, cin), lambda i: (i, 0, 0))]
                + [full_spec(a) for a in consts],
        out_specs=pl.BlockSpec((bt, dout), lambda i: (i, 0)),
        compiler_params=pltpu.CompilerParams(
            dimension_semantics=("parallel",)),
    )(x_lc, *consts)

    out = out[:B]
    return out[:, 0:4], out[:, 4:5], out[:, 5:6]


# -----------------------------------------------------------------------------
# Deterministic parameter init (shapes from FlowRegClf_1D.__init__).
# flattenlen assumes a batch-1 sample_input, as in typical use of the module.
# -----------------------------------------------------------------------------
def flatten_len_for(L):
    l = L
    for k in (16, 8, 5):
        l = (l - k + 1) // 2
    return 32 * l


def init_params(key, flatten_len):
    keys = iter(jax.random.split(key, 24))

    def u(shape, fan_in):
        bound = 1.0 / float(np.sqrt(fan_in))
        return jax.random.uniform(next(keys), shape, jnp.float32, -bound, bound)

    p = {}
    p["conv1_w"] = u((8, 4, 16), 4 * 16)
    p["conv1_b"] = u((8,), 4 * 16)
    p["conv2_w"] = u((16, 8, 8), 8 * 8)
    p["conv2_b"] = u((16,), 8 * 8)
    p["conv3_w"] = u((32, 16, 5), 16 * 5)
    p["conv3_b"] = u((32,), 16 * 5)
    for name, dout in (("classify", 4), ("vel", 1), ("len", 1)):
        p[f"{name}1_w"] = u((flatten_len, 64), flatten_len)
        p[f"{name}1_b"] = u((64,), flatten_len)
        p[f"{name}2_w"] = u((64, 64), 64)
        p[f"{name}2_b"] = u((64,), 64)
        p[f"{name}3_w"] = u((64, dout), 64)
        p[f"{name}3_b"] = u((dout,), 64)
    return p


# -----------------------------------------------------------------------------
# Pure-JAX reference (same math as the torch module) for an in-script check.
# -----------------------------------------------------------------------------
def ref_forward(x, p):
    hi = jax.lax.Precision.HIGHEST

    def conv_block(x, w, b):
        k = w.shape[2]
        ol = x.shape[2] - k + 1
        cols = jnp.stack([x[:, :, t:t + ol] for t in range(k)], axis=3)  # (B,Ci,OL,K)
        y = jnp.einsum("bclk,ock->bol", cols, w, precision=hi)
        y = jnp.maximum(y + b[None, :, None], 0.0)
        pool_l = ol // 2
        return jnp.max(y[:, :, :2 * pool_l].reshape(
            y.shape[0], y.shape[1], pool_l, 2), axis=3)

    y = conv_block(x, p["conv1_w"], p["conv1_b"])
    y = conv_block(y, p["conv2_w"], p["conv2_b"])
    y = conv_block(y, p["conv3_w"], p["conv3_b"])
    flat = y.reshape(y.shape[0], -1)

    def mlp(pre):
        h = jnp.maximum(jnp.dot(flat, p[f"{pre}1_w"], precision=hi) + p[f"{pre}1_b"], 0.0)
        h = jnp.maximum(jnp.dot(h, p[f"{pre}2_w"], precision=hi) + p[f"{pre}2_b"], 0.0)
        return jnp.dot(h, p[f"{pre}3_w"], precision=hi) + p[f"{pre}3_b"]

    return mlp("classify"), mlp("vel"), mlp("len")


if __name__ == "__main__":
    # Sequence length must be >= 53 for kernel sizes 16/8/5; L=79 -> flattenlen 128.
    B, C, L = 2, 4, 79
    key = jax.random.PRNGKey(0)
    kp, kx = jax.random.split(key)
    params = init_params(kp, flatten_len_for(L))
    x = jax.random.normal(kx, (B, C, L), dtype=jnp.float32)

    fwd = jax.jit(flow_reg_clf_forward)
    class_pred, vel_reg, len_reg = jax.block_until_ready(fwd(x, params))

    assert class_pred.shape == (B, 4)
    assert vel_reg.shape == (B, 1)
    assert len_reg.shape == (B, 1)

    r_cls, r_vel, r_len = ref_forward(x, params)
    np.testing.assert_allclose(np.asarray(class_pred), np.asarray(r_cls),
                               rtol=5e-3, atol=5e-4)
    np.testing.assert_allclose(np.asarray(vel_reg), np.asarray(r_vel),
                               rtol=5e-3, atol=5e-4)
    np.testing.assert_allclose(np.asarray(len_reg), np.asarray(r_len),
                               rtol=5e-3, atol=5e-4)
    print("KERNEL_OK")
</pallas_src>

<mosaic_0001>
module attributes {stable_mosaic.version = 11 : i64} {
  func.func @fused_kernel(%arg0: i32, %arg1: memref<2x79x4xf32, #tpu.memory_space<vmem>>, %arg2: memref<64x8xf32, #tpu.memory_space<vmem>>, %arg3: memref<1x8xf32, #tpu.memory_space<vmem>>, %arg4: memref<64x16xf32, #tpu.memory_space<vmem>>, %arg5: memref<1x16xf32, #tpu.memory_space<vmem>>, %arg6: memref<80x32xf32, #tpu.memory_space<vmem>>, %arg7: memref<1x32xf32, #tpu.memory_space<vmem>>, %arg8: memref<32x64xf32, #tpu.memory_space<vmem>>, %arg9: memref<32x64xf32, #tpu.memory_space<vmem>>, %arg10: memref<12x25xf32, #tpu.memory_space<vmem>>, %arg11: memref<12x25xf32, #tpu.memory_space<vmem>>, %arg12: memref<4x8xf32, #tpu.memory_space<vmem>>, %arg13: memref<4x8xf32, #tpu.memory_space<vmem>>, %arg14: memref<128x192xf32, #tpu.memory_space<vmem>>, %arg15: memref<1x192xf32, #tpu.memory_space<vmem>>, %arg16: memref<192x192xf32, #tpu.memory_space<vmem>>, %arg17: memref<1x192xf32, #tpu.memory_space<vmem>>, %arg18: memref<192x6xf32, #tpu.memory_space<vmem>>, %arg19: memref<1x6xf32, #tpu.memory_space<vmem>>, %arg20: memref<2x6xf32, #tpu.memory_space<vmem>>) attributes {dimension_semantics = [#tpu.dimension_semantics<parallel>], iteration_bounds = array<i64: 1>, scalar_prefetch = 0 : i64, scratch_operands = 0 : i64, tpu.core_type = #tpu.core_type<tc>, window_params = [{transform_indices = @transform_0, window_bounds = array<i64: 2, 79, 4>}, {pipeline_mode = #tpu.pipeline_mode<synchronous>, transform_indices = @transform_1, window_bounds = array<i64: 64, 8>}, {pipeline_mode = #tpu.pipeline_mode<synchronous>, transform_indices = @transform_2, window_bounds = array<i64: 1, 8>}, {pipeline_mode = #tpu.pipeline_mode<synchronous>, transform_indices = @transform_3, window_bounds = array<i64: 64, 16>}, {pipeline_mode = #tpu.pipeline_mode<synchronous>, transform_indices = @transform_4, window_bounds = array<i64: 1, 16>}, {pipeline_mode = #tpu.pipeline_mode<synchronous>, transform_indices = @transform_5, window_bounds = array<i64: 80, 32>}, {pipeline_mode = #tpu.pipeline_mode<synchronous>, transform_indices = @transform_6, window_bounds = array<i64: 1, 32>}, {pipeline_mode = #tpu.pipeline_mode<synchronous>, transform_indices = @transform_7, window_bounds = array<i64: 32, 64>}, {pipeline_mode = #tpu.pipeline_mode<synchronous>, transform_indices = @transform_8, window_bounds = array<i64: 32, 64>}, {pipeline_mode = #tpu.pipeline_mode<synchronous>, transform_indices = @transform_9, window_bounds = array<i64: 12, 25>}, {pipeline_mode = #tpu.pipeline_mode<synchronous>, transform_indices = @transform_10, window_bounds = array<i64: 12, 25>}, {pipeline_mode = #tpu.pipeline_mode<synchronous>, transform_indices = @transform_11, window_bounds = array<i64: 4, 8>}, {pipeline_mode = #tpu.pipeline_mode<synchronous>, transform_indices = @transform_12, window_bounds = array<i64: 4, 8>}, {pipeline_mode = #tpu.pipeline_mode<synchronous>, transform_indices = @transform_13, window_bounds = array<i64: 128, 192>}, {pipeline_mode = #tpu.pipeline_mode<synchronous>, transform_indices = @transform_14, window_bounds = array<i64: 1, 192>}, {pipeline_mode = #tpu.pipeline_mode<synchronous>, transform_indices = @transform_15, window_bounds = array<i64: 192, 192>}, {pipeline_mode = #tpu.pipeline_mode<synchronous>, transform_indices = @transform_16, window_bounds = array<i64: 1, 192>}, {pipeline_mode = #tpu.pipeline_mode<synchronous>, transform_indices = @transform_17, window_bounds = array<i64: 192, 6>}, {pipeline_mode = #tpu.pipeline_mode<synchronous>, transform_indices = @transform_18, window_bounds = array<i64: 1, 6>}, {transform_indices = @transform_19, window_bounds = array<i64: 2, 6>}]} {
    %c0 = arith.constant 0 : index
    %c0_0 = arith.constant 0 : index
    %c0_1 = arith.constant 0 : index
    %0 = vector.load %arg1[%c0, %c0_0, %c0_1] : memref<2x79x4xf32, #tpu.memory_space<vmem>>, vector<2x79x4xf32>
    %1 = vector.extract_strided_slice %0 {offsets = [0, 0, 0], sizes = [1, 79, 4], strides = [1, 1, 1]} : vector<2x79x4xf32> to vector<1x79x4xf32>
    %2 = vector.shape_cast %1 : vector<1x79x4xf32> to vector<79x4xf32>
    %3 = vector.extract_strided_slice %0 {offsets = [1, 0, 0], sizes = [1, 79, 4], strides = [1, 1, 1]} : vector<2x79x4xf32> to vector<1x79x4xf32>
    %4 = vector.shape_cast %3 : vector<1x79x4xf32> to vector<79x4xf32>
    %c0_2 = arith.constant 0 : index
    %c0_3 = arith.constant 0 : index
    %5 = vector.load %arg2[%c0_2, %c0_3] : memref<64x8xf32, #tpu.memory_space<vmem>>, vector<64x8xf32>
    %c0_4 = arith.constant 0 : index
    %c0_5 = arith.constant 0 : index
    %6 = vector.load %arg3[%c0_4, %c0_5] : memref<1x8xf32, #tpu.memory_space<vmem>>, vector<1x8xf32>
    %c0_6 = arith.constant 0 : index
    %c0_7 = arith.constant 0 : index
    %7 = vector.load %arg8[%c0_6, %c0_7] : memref<32x64xf32, #tpu.memory_space<vmem>>, vector<32x64xf32>
    %c0_8 = arith.constant 0 : index
    %c0_9 = arith.constant 0 : index
    %8 = vector.load %arg9[%c0_8, %c0_9] : memref<32x64xf32, #tpu.memory_space<vmem>>, vector<32x64xf32>
    %9 = vector.extract_strided_slice %2 {offsets = [0, 0], sizes = [64, 4], strides = [1, 1]} : vector<79x4xf32> to vector<64x4xf32>
    %10 = vector.extract_strided_slice %2 {offsets = [1, 0], sizes = [64, 4], strides = [1, 1]} : vector<79x4xf32> to vector<64x4xf32>
    %11 = vector.extract_strided_slice %2 {offsets = [2, 0], sizes = [64, 4], strides = [1, 1]} : vector<79x4xf32> to vector<64x4xf32>
    %12 = vector.extract_strided_slice %2 {offsets = [3, 0], sizes = [64, 4], strides = [1, 1]} : vector<79x4xf32> to vector<64x4xf32>
    %13 = vector.extract_strided_slice %2 {offsets = [4, 0], sizes = [64, 4], strides = [1, 1]} : vector<79x4xf32> to vector<64x4xf32>
    %14 = vector.extract_strided_slice %2 {offsets = [5, 0], sizes = [64, 4], strides = [1, 1]} : vector<79x4xf32> to vector<64x4xf32>
    %15 = vector.extract_strided_slice %2 {offsets = [6, 0], sizes = [64, 4], strides = [1, 1]} : vector<79x4xf32> to vector<64x4xf32>
    %16 = vector.extract_strided_slice %2 {offsets = [7, 0], sizes = [64, 4], strides = [1, 1]} : vector<79x4xf32> to vector<64x4xf32>
    %17 = vector.extract_strided_slice %2 {offsets = [8, 0], sizes = [64, 4], strides = [1, 1]} : vector<79x4xf32> to vector<64x4xf32>
    %18 = vector.extract_strided_slice %2 {offsets = [9, 0], sizes = [64, 4], strides = [1, 1]} : vector<79x4xf32> to vector<64x4xf32>
    %19 = vector.extract_strided_slice %2 {offsets = [10, 0], sizes = [64, 4], strides = [1, 1]} : vector<79x4xf32> to vector<64x4xf32>
    %20 = vector.extract_strided_slice %2 {offsets = [11, 0], sizes = [64, 4], strides = [1, 1]} : vector<79x4xf32> to vector<64x4xf32>
    %21 = vector.extract_strided_slice %2 {offsets = [12, 0], sizes = [64, 4], strides = [1, 1]} : vector<79x4xf32> to vector<64x4xf32>
    %22 = vector.extract_strided_slice %2 {offsets = [13, 0], sizes = [64, 4], strides = [1, 1]} : vector<79x4xf32> to vector<64x4xf32>
    %23 = vector.extract_strided_slice %2 {offsets = [14, 0], sizes = [64, 4], strides = [1, 1]} : vector<79x4xf32> to vector<64x4xf32>
    %24 = vector.extract_strided_slice %2 {offsets = [15, 0], sizes = [64, 4], strides = [1, 1]} : vector<79x4xf32> to vector<64x4xf32>
    %25 = tpu.concatenate %9, %10, %11, %12, %13, %14, %15, %16, %17, %18, %19, %20, %21, %22, %23, %24 in 1 : vector<64x4xf32>, vector<64x4xf32>, vector<64x4xf32>, vector<64x4xf32>, vector<64x4xf32>, vector<64x4xf32>, vector<64x4xf32>, vector<64x4xf32>, vector<64x4xf32>, vector<64x4xf32>, vector<64x4xf32>, vector<64x4xf32>, vector<64x4xf32>, vector<64x4xf32>, vector<64x4xf32>, vector<64x4xf32> -> vector<64x64xf32>
    %cst = arith.constant dense<0.000000e+00> : vector<64x8xf32>
    %26 = tpu.matmul %25, %5, %cst {dimension_numbers = #tpu.dot_dimension_numbers<[1], [0], [0], [1], [0, 0, 1, 1], [], []>} : vector<64x64xf32>, vector<64x8xf32>, vector<64x8xf32> -> vector<64x8xf32>
    %27 = vector.broadcast %6 : vector<1x8xf32> to vector<64x8xf32>
    %28 = arith.addf %26, %27 : vector<64x8xf32>
    %cst_10 = arith.constant 0.000000e+00 : f32
    %29 = vector.broadcast %cst_10 : f32 to vector<64x8xf32>
    %30 = arith.maximumf %28, %29 : vector<64x8xf32>
    %cst_11 = arith.constant dense<0.000000e+00> : vector<32x8xf32>
    %31 = tpu.matmul %7, %30, %cst_11 {dimension_numbers = #tpu.dot_dimension_numbers<[1], [0], [0], [1], [0, 0, 1, 1], [], []>} : vector<32x64xf32>, vector<64x8xf32>, vector<32x8xf32> -> vector<32x8xf32>
    %cst_12 = arith.constant dense<0.000000e+00> : vector<32x8xf32>
    %32 = tpu.matmul %8, %30, %cst_12 {dimension_numbers = #tpu.dot_dimension_numbers<[1], [0], [0], [1], [0, 0, 1, 1], [], []>} : vector<32x64xf32>, vector<64x8xf32>, vector<32x8xf32> -> vector<32x8xf32>
    %33 = arith.maximumf %31, %32 : vector<32x8xf32>
    %34 = vector.extract_strided_slice %4 {offsets = [0, 0], sizes = [64, 4], strides = [1, 1]} : vector<79x4xf32> to vector<64x4xf32>
    %35 = vector.extract_strided_slice %4 {offsets = [1, 0], sizes = [64, 4], strides = [1, 1]} : vector<79x4xf32> to vector<64x4xf32>
    %36 = vector.extract_strided_slice %4 {offsets = [2, 0], sizes = [64, 4], strides = [1, 1]} : vector<79x4xf32> to vector<64x4xf32>
    %37 = vector.extract_strided_slice %4 {offsets = [3, 0], sizes = [64, 4], strides = [1, 1]} : vector<79x4xf32> to vector<64x4xf32>
    %38 = vector.extract_strided_slice %4 {offsets = [4, 0], sizes = [64, 4], strides = [1, 1]} : vector<79x4xf32> to vector<64x4xf32>
    %39 = vector.extract_strided_slice %4 {offsets = [5, 0], sizes = [64, 4], strides = [1, 1]} : vector<79x4xf32> to vector<64x4xf32>
    %40 = vector.extract_strided_slice %4 {offsets = [6, 0], sizes = [64, 4], strides = [1, 1]} : vector<79x4xf32> to vector<64x4xf32>
    %41 = vector.extract_strided_slice %4 {offsets = [7, 0], sizes = [64, 4], strides = [1, 1]} : vector<79x4xf32> to vector<64x4xf32>
    %42 = vector.extract_strided_slice %4 {offsets = [8, 0], sizes = [64, 4], strides = [1, 1]} : vector<79x4xf32> to vector<64x4xf32>
    %43 = vector.extract_strided_slice %4 {offsets = [9, 0], sizes = [64, 4], strides = [1, 1]} : vector<79x4xf32> to vector<64x4xf32>
    %44 = vector.extract_strided_slice %4 {offsets = [10, 0], sizes = [64, 4], strides = [1, 1]} : vector<79x4xf32> to vector<64x4xf32>
    %45 = vector.extract_strided_slice %4 {offsets = [11, 0], sizes = [64, 4], strides = [1, 1]} : vector<79x4xf32> to vector<64x4xf32>
    %46 = vector.extract_strided_slice %4 {offsets = [12, 0], sizes = [64, 4], strides = [1, 1]} : vector<79x4xf32> to vector<64x4xf32>
    %47 = vector.extract_strided_slice %4 {offsets = [13, 0], sizes = [64, 4], strides = [1, 1]} : vector<79x4xf32> to vector<64x4xf32>
    %48 = vector.extract_strided_slice %4 {offsets = [14, 0], sizes = [64, 4], strides = [1, 1]} : vector<79x4xf32> to vector<64x4xf32>
    %49 = vector.extract_strided_slice %4 {offsets = [15, 0], sizes = [64, 4], strides = [1, 1]} : vector<79x4xf32> to vector<64x4xf32>
    %50 = tpu.concatenate %34, %35, %36, %37, %38, %39, %40, %41, %42, %43, %44, %45, %46, %47, %48, %49 in 1 : vector<64x4xf32>, vector<64x4xf32>, vector<64x4xf32>, vector<64x4xf32>, vector<64x4xf32>, vector<64x4xf32>, vector<64x4xf32>, vector<64x4xf32>, vector<64x4xf32>, vector<64x4xf32>, vector<64x4xf32>, vector<64x4xf32>, vector<64x4xf32>, vector<64x4xf32>, vector<64x4xf32>, vector<64x4xf32> -> vector<64x64xf32>
    %cst_13 = arith.constant dense<0.000000e+00> : vector<64x8xf32>
    %51 = tpu.matmul %50, %5, %cst_13 {dimension_numbers = #tpu.dot_dimension_numbers<[1], [0], [0], [1], [0, 0, 1, 1], [], []>} : vector<64x64xf32>, vector<64x8xf32>, vector<64x8xf32> -> vector<64x8xf32>
    %52 = vector.broadcast %6 : vector<1x8xf32> to vector<64x8xf32>
    %53 = arith.addf %51, %52 : vector<64x8xf32>
    %cst_14 = arith.constant 0.000000e+00 : f32
    %54 = vector.broadcast %cst_14 : f32 to vector<64x8xf32>
    %55 = arith.maximumf %53, %54 : vector<64x8xf32>
    %cst_15 = arith.constant dense<0.000000e+00> : vector<32x8xf32>
    %56 = tpu.matmul %7, %55, %cst_15 {dimension_numbers = #tpu.dot_dimension_numbers<[1], [0], [0], [1], [0, 0, 1, 1], [], []>} : vector<32x64xf32>, vector<64x8xf32>, vector<32x8xf32> -> vector<32x8xf32>
    %cst_16 = arith.constant dense<0.000000e+00> : vector<32x8xf32>
    %57 = tpu.matmul %8, %55, %cst_16 {dimension_numbers = #tpu.dot_dimension_numbers<[1], [0], [0], [1], [0, 0, 1, 1], [], []>} : vector<32x64xf32>, vector<64x8xf32>, vector<32x8xf32> -> vector<32x8xf32>
    %58 = arith.maximumf %56, %57 : vector<32x8xf32>
    %c0_17 = arith.constant 0 : index
    %c0_18 = arith.constant 0 : index
    %59 = vector.load %arg4[%c0_17, %c0_18] : memref<64x16xf32, #tpu.memory_space<vmem>>, vector<64x16xf32>
    %c0_19 = arith.constant 0 : index
    %c0_20 = arith.constant 0 : index
    %60 = vector.load %arg5[%c0_19, %c0_20] : memref<1x16xf32, #tpu.memory_space<vmem>>, vector<1x16xf32>
    %c0_21 = arith.constant 0 : index
    %c0_22 = arith.constant 0 : index
    %61 = vector.load %arg10[%c0_21, %c0_22] : memref<12x25xf32, #tpu.memory_space<vmem>>, vector<12x25xf32>
    %c0_23 = arith.constant 0 : index
    %c0_24 = arith.constant 0 : index
    %62 = vector.load %arg11[%c0_23, %c0_24] : memref<12x25xf32, #tpu.memory_space<vmem>>, vector<12x25xf32>
    %63 = vector.extract_strided_slice %33 {offsets = [0, 0], sizes = [25, 8], strides = [1, 1]} : vector<32x8xf32> to vector<25x8xf32>
    %64 = vector.extract_strided_slice %33 {offsets = [1, 0], sizes = [25, 8], strides = [1, 1]} : vector<32x8xf32> to vector<25x8xf32>
    %65 = vector.extract_strided_slice %33 {offsets = [2, 0], sizes = [25, 8], strides = [1, 1]} : vector<32x8xf32> to vector<25x8xf32>
    %66 = vector.extract_strided_slice %33 {offsets = [3, 0], sizes = [25, 8], strides = [1, 1]} : vector<32x8xf32> to vector<25x8xf32>
    %67 = vector.extract_strided_slice %33 {offsets = [4, 0], sizes = [25, 8], strides = [1, 1]} : vector<32x8xf32> to vector<25x8xf32>
    %68 = vector.extract_strided_slice %33 {offsets = [5, 0], sizes = [25, 8], strides = [1, 1]} : vector<32x8xf32> to vector<25x8xf32>
    %69 = vector.extract_strided_slice %33 {offsets = [6, 0], sizes = [25, 8], strides = [1, 1]} : vector<32x8xf32> to vector<25x8xf32>
    %70 = vector.extract_strided_slice %33 {offsets = [7, 0], sizes = [25, 8], strides = [1, 1]} : vector<32x8xf32> to vector<25x8xf32>
    %71 = tpu.concatenate %63, %64, %65, %66, %67, %68, %69, %70 in 1 : vector<25x8xf32>, vector<25x8xf32>, vector<25x8xf32>, vector<25x8xf32>, vector<25x8xf32>, vector<25x8xf32>, vector<25x8xf32>, vector<25x8xf32> -> vector<25x64xf32>
    %cst_25 = arith.constant dense<0.000000e+00> : vector<25x16xf32>
    %72 = tpu.matmul %71, %59, %cst_25 {dimension_numbers = #tpu.dot_dimension_numbers<[1], [0], [0], [1], [0, 0, 1, 1], [], []>} : vector<25x64xf32>, vector<64x16xf32>, vector<25x16xf32> -> vector<25x16xf32>
    %73 = vector.broadcast %60 : vector<1x16xf32> to vector<25x16xf32>
    %74 = arith.addf %72, %73 : vector<25x16xf32>
    %cst_26 = arith.constant 0.000000e+00 : f32
    %75 = vector.broadcast %cst_26 : f32 to vector<25x16xf32>
    %76 = arith.maximumf %74, %75 : vector<25x16xf32>
    %cst_27 = arith.constant dense<0.000000e+00> : vector<12x16xf32>
    %77 = tpu.matmul %61, %76, %cst_27 {dimension_numbers = #tpu.dot_dimension_numbers<[1], [0], [0], [1], [0, 0, 1, 1], [], []>} : vector<12x25xf32>, vector<25x16xf32>, vector<12x16xf32> -> vector<12x16xf32>
    %cst_28 = arith.constant dense<0.000000e+00> : vector<12x16xf32>
    %78 = tpu.matmul %62, %76, %cst_28 {dimension_numbers = #tpu.dot_dimension_numbers<[1], [0], [0], [1], [0, 0, 1, 1], [], []>} : vector<12x25xf32>, vector<25x16xf32>, vector<12x16xf32> -> vector<12x16xf32>
    %79 = arith.maximumf %77, %78 : vector<12x16xf32>
    %80 = vector.extract_strided_slice %58 {offsets = [0, 0], sizes = [25, 8], strides = [1, 1]} : vector<32x8xf32> to vector<25x8xf32>
    %81 = vector.extract_strided_slice %58 {offsets = [1, 0], sizes = [25, 8], strides = [1, 1]} : vector<32x8xf32> to vector<25x8xf32>
    %82 = vector.extract_strided_slice %58 {offsets = [2, 0], sizes = [25, 8], strides = [1, 1]} : vector<32x8xf32> to vector<25x8xf32>
    %83 = vector.extract_strided_slice %58 {offsets = [3, 0], sizes = [25, 8], strides = [1, 1]} : vector<32x8xf32> to vector<25x8xf32>
    %84 = vector.extract_strided_slice %58 {offsets = [4, 0], sizes = [25, 8], strides = [1, 1]} : vector<32x8xf32> to vector<25x8xf32>
    %85 = vector.extract_strided_slice %58 {offsets = [5, 0], sizes = [25, 8], strides = [1, 1]} : vector<32x8xf32> to vector<25x8xf32>
    %86 = vector.extract_strided_slice %58 {offsets = [6, 0], sizes = [25, 8], strides = [1, 1]} : vector<32x8xf32> to vector<25x8xf32>
    %87 = vector.extract_strided_slice %58 {offsets = [7, 0], sizes = [25, 8], strides = [1, 1]} : vector<32x8xf32> to vector<25x8xf32>
    %88 = tpu.concatenate %80, %81, %82, %83, %84, %85, %86, %87 in 1 : vector<25x8xf32>, vector<25x8xf32>, vector<25x8xf32>, vector<25x8xf32>, vector<25x8xf32>, vector<25x8xf32>, vector<25x8xf32>, vector<25x8xf32> -> vector<25x64xf32>
    %cst_29 = arith.constant dense<0.000000e+00> : vector<25x16xf32>
    %89 = tpu.matmul %88, %59, %cst_29 {dimension_numbers = #tpu.dot_dimension_numbers<[1], [0], [0], [1], [0, 0, 1, 1], [], []>} : vector<25x64xf32>, vector<64x16xf32>, vector<25x16xf32> -> vector<25x16xf32>
    %90 = vector.broadcast %60 : vector<1x16xf32> to vector<25x16xf32>
    %91 = arith.addf %89, %90 : vector<25x16xf32>
    %cst_30 = arith.constant 0.000000e+00 : f32
    %92 = vector.broadcast %cst_30 : f32 to vector<25x16xf32>
    %93 = arith.maximumf %91, %92 : vector<25x16xf32>
    %cst_31 = arith.constant dense<0.000000e+00> : vector<12x16xf32>
    %94 = tpu.matmul %61, %93, %cst_31 {dimension_numbers = #tpu.dot_dimension_numbers<[1], [0], [0], [1], [0, 0, 1, 1], [], []>} : vector<12x25xf32>, vector<25x16xf32>, vector<12x16xf32> -> vector<12x16xf32>
    %cst_32 = arith.constant dense<0.000000e+00> : vector<12x16xf32>
    %95 = tpu.matmul %62, %93, %cst_32 {dimension_numbers = #tpu.dot_dimension_numbers<[1], [0], [0], [1], [0, 0, 1, 1], [], []>} : vector<12x25xf32>, vector<25x16xf32>, vector<12x16xf32> -> vector<12x16xf32>
    %96 = arith.maximumf %94, %95 : vector<12x16xf32>
    %c0_33 = arith.constant 0 : index
    %c0_34 = arith.constant 0 : index
    %97 = vector.load %arg6[%c0_33, %c0_34] : memref<80x32xf32, #tpu.memory_space<vmem>>, vector<80x32xf32>
    %c0_35 = arith.constant 0 : index
    %c0_36 = arith.constant 0 : index
    %98 = vector.load %arg7[%c0_35, %c0_36] : memref<1x32xf32, #tpu.memory_space<vmem>>, vector<1x32xf32>
    %c0_37 = arith.constant 0 : index
    %c0_38 = arith.constant 0 : index
    %99 = vector.load %arg12[%c0_37, %c0_38] : memref<4x8xf32, #tpu.memory_space<vmem>>, vector<4x8xf32>
    %c0_39 = arith.constant 0 : index
    %c0_40 = arith.constant 0 : index
    %100 = vector.load %arg13[%c0_39, %c0_40] : memref<4x8xf32, #tpu.memory_space<vmem>>, vector<4x8xf32>
    %101 = vector.extract_strided_slice %79 {offsets = [0, 0], sizes = [8, 16], strides = [1, 1]} : vector<12x16xf32> to vector<8x16xf32>
    %102 = vector.extract_strided_slice %79 {offsets = [1, 0], sizes = [8, 16], strides = [1, 1]} : vector<12x16xf32> to vector<8x16xf32>
    %103 = vector.extract_strided_slice %79 {offsets = [2, 0], sizes = [8, 16], strides = [1, 1]} : vector<12x16xf32> to vector<8x16xf32>
    %104 = vector.extract_strided_slice %79 {offsets = [3, 0], sizes = [8, 16], strides = [1, 1]} : vector<12x16xf32> to vector<8x16xf32>
    %105 = vector.extract_strided_slice %79 {offsets = [4, 0], sizes = [8, 16], strides = [1, 1]} : vector<12x16xf32> to vector<8x16xf32>
    %106 = tpu.concatenate %101, %102, %103, %104, %105 in 1 : vector<8x16xf32>, vector<8x16xf32>, vector<8x16xf32>, vector<8x16xf32>, vector<8x16xf32> -> vector<8x80xf32>
    %cst_41 = arith.constant dense<0.000000e+00> : vector<8x32xf32>
    %107 = tpu.matmul %106, %97, %cst_41 {dimension_numbers = #tpu.dot_dimension_numbers<[1], [0], [0], [1], [0, 0, 1, 1], [], []>} : vector<8x80xf32>, vector<80x32xf32>, vector<8x32xf32> -> vector<8x32xf32>
    %108 = vector.broadcast %98 : vector<1x32xf32> to vector<8x32xf32>
    %109 = arith.addf %107, %108 : vector<8x32xf32>
    %cst_42 = arith.constant 0.000000e+00 : f32
    %110 = vector.broadcast %cst_42 : f32 to vector<8x32xf32>
    %111 = arith.maximumf %109, %110 : vector<8x32xf32>
    %cst_43 = arith.constant dense<0.000000e+00> : vector<4x32xf32>
    %112 = tpu.matmul %99, %111, %cst_43 {dimension_numbers = #tpu.dot_dimension_numbers<[1], [0], [0], [1], [0, 0, 1, 1], [], []>} : vector<4x8xf32>, vector<8x32xf32>, vector<4x32xf32> -> vector<4x32xf32>
    %cst_44 = arith.constant dense<0.000000e+00> : vector<4x32xf32>
    %113 = tpu.matmul %100, %111, %cst_44 {dimension_numbers = #tpu.dot_dimension_numbers<[1], [0], [0], [1], [0, 0, 1, 1], [], []>} : vector<4x8xf32>, vector<8x32xf32>, vector<4x32xf32> -> vector<4x32xf32>
    %114 = arith.maximumf %112, %113 : vector<4x32xf32>
    %115 = vector.extract_strided_slice %96 {offsets = [0, 0], sizes = [8, 16], strides = [1, 1]} : vector<12x16xf32> to vector<8x16xf32>
    %116 = vector.extract_strided_slice %96 {offsets = [1, 0], sizes = [8, 16], strides = [1, 1]} : vector<12x16xf32> to vector<8x16xf32>
    %117 = vector.extract_strided_slice %96 {offsets = [2, 0], sizes = [8, 16], strides = [1, 1]} : vector<12x16xf32> to vector<8x16xf32>
    %118 = vector.extract_strided_slice %96 {offsets = [3, 0], sizes = [8, 16], strides = [1, 1]} : vector<12x16xf32> to vector<8x16xf32>
    %119 = vector.extract_strided_slice %96 {offsets = [4, 0], sizes = [8, 16], strides = [1, 1]} : vector<12x16xf32> to vector<8x16xf32>
    %120 = tpu.concatenate %115, %116, %117, %118, %119 in 1 : vector<8x16xf32>, vector<8x16xf32>, vector<8x16xf32>, vector<8x16xf32>, vector<8x16xf32> -> vector<8x80xf32>
    %cst_45 = arith.constant dense<0.000000e+00> : vector<8x32xf32>
    %121 = tpu.matmul %120, %97, %cst_45 {dimension_numbers = #tpu.dot_dimension_numbers<[1], [0], [0], [1], [0, 0, 1, 1], [], []>} : vector<8x80xf32>, vector<80x32xf32>, vector<8x32xf32> -> vector<8x32xf32>
    %122 = vector.broadcast %98 : vector<1x32xf32> to vector<8x32xf32>
    %123 = arith.addf %121, %122 : vector<8x32xf32>
    %cst_46 = arith.constant 0.000000e+00 : f32
    %124 = vector.broadcast %cst_46 : f32 to vector<8x32xf32>
    %125 = arith.maximumf %123, %124 : vector<8x32xf32>
    %cst_47 = arith.constant dense<0.000000e+00> : vector<4x32xf32>
    %126 = tpu.matmul %99, %125, %cst_47 {dimension_numbers = #tpu.dot_dimension_numbers<[1], [0], [0], [1], [0, 0, 1, 1], [], []>} : vector<4x8xf32>, vector<8x32xf32>, vector<4x32xf32> -> vector<4x32xf32>
    %cst_48 = arith.constant dense<0.000000e+00> : vector<4x32xf32>
    %127 = tpu.matmul %100, %125, %cst_48 {dimension_numbers = #tpu.dot_dimension_numbers<[1], [0], [0], [1], [0, 0, 1, 1], [], []>} : vector<4x8xf32>, vector<8x32xf32>, vector<4x32xf32> -> vector<4x32xf32>
    %128 = arith.maximumf %126, %127 : vector<4x32xf32>
    %129 = vector.extract_strided_slice %114 {offsets = [0, 0], sizes = [1, 32], strides = [1, 1]} : vector<4x32xf32> to vector<1x32xf32>
    %130 = vector.extract_strided_slice %114 {offsets = [1, 0], sizes = [1, 32], strides = [1, 1]} : vector<4x32xf32> to vector<1x32xf32>
    %131 = vector.extract_strided_slice %114 {offsets = [2, 0], sizes = [1, 32], strides = [1, 1]} : vector<4x32xf32> to vector<1x32xf32>
    %132 = vector.extract_strided_slice %114 {offsets = [3, 0], sizes = [1, 32], strides = [1, 1]} : vector<4x32xf32> to vector<1x32xf32>
    %133 = tpu.concatenate %129, %130, %131, %132 in 1 : vector<1x32xf32>, vector<1x32xf32>, vector<1x32xf32>, vector<1x32xf32> -> vector<1x128xf32>
    %134 = vector.extract_strided_slice %128 {offsets = [0, 0], sizes = [1, 32], strides = [1, 1]} : vector<4x32xf32> to vector<1x32xf32>
    %135 = vector.extract_strided_slice %128 {offsets = [1, 0], sizes = [1, 32], strides = [1, 1]} : vector<4x32xf32> to vector<1x32xf32>
    %136 = vector.extract_strided_slice %128 {offsets = [2, 0], sizes = [1, 32], strides = [1, 1]} : vector<4x32xf32> to vector<1x32xf32>
    %137 = vector.extract_strided_slice %128 {offsets = [3, 0], sizes = [1, 32], strides = [1, 1]} : vector<4x32xf32> to vector<1x32xf32>
    %138 = tpu.concatenate %134, %135, %136, %137 in 1 : vector<1x32xf32>, vector<1x32xf32>, vector<1x32xf32>, vector<1x32xf32> -> vector<1x128xf32>
    %139 = tpu.concatenate %133, %138 in 0 : vector<1x128xf32>, vector<1x128xf32> -> vector<2x128xf32>
    %c0_49 = arith.constant 0 : index
    %c0_50 = arith.constant 0 : index
    %140 = vector.load %arg14[%c0_49, %c0_50] : memref<128x192xf32, #tpu.memory_space<vmem>>, vector<128x192xf32>
    %cst_51 = arith.constant dense<0.000000e+00> : vector<2x192xf32>
    %141 = tpu.matmul %139, %140, %cst_51 {dimension_numbers = #tpu.dot_dimension_numbers<[1], [0], [0], [1], [0, 0, 1, 1], [], []>} : vector<2x128xf32>, vector<128x192xf32>, vector<2x192xf32> -> vector<2x192xf32>
    %c0_52 = arith.constant 0 : index
    %c0_53 = arith.constant 0 : index
    %142 = vector.load %arg15[%c0_52, %c0_53] : memref<1x192xf32, #tpu.memory_space<vmem>>, vector<1x192xf32>
    %143 = vector.broadcast %142 : vector<1x192xf32> to vector<2x192xf32>
    %144 = arith.addf %141, %143 : vector<2x192xf32>
    %cst_54 = arith.constant 0.000000e+00 : f32
    %145 = vector.broadcast %cst_54 : f32 to vector<2x192xf32>
    %146 = arith.maximumf %144, %145 : vector<2x192xf32>
    %c0_55 = arith.constant 0 : index
    %c0_56 = arith.constant 0 : index
    %147 = vector.load %arg16[%c0_55, %c0_56] : memref<192x192xf32, #tpu.memory_space<vmem>>, vector<192x192xf32>
    %cst_57 = arith.constant dense<0.000000e+00> : vector<2x192xf32>
    %148 = tpu.matmul %146, %147, %cst_57 {dimension_numbers = #tpu.dot_dimension_numbers<[1], [0], [0], [1], [0, 0, 1, 1], [], []>} : vector<2x192xf32>, vector<192x192xf32>, vector<2x192xf32> -> vector<2x192xf32>
    %c0_58 = arith.constant 0 : index
    %c0_59 = arith.constant 0 : index
    %149 = vector.load %arg17[%c0_58, %c0_59] : memref<1x192xf32, #tpu.memory_space<vmem>>, vector<1x192xf32>
    %150 = vector.broadcast %149 : vector<1x192xf32> to vector<2x192xf32>
    %151 = arith.addf %148, %150 : vector<2x192xf32>
    %cst_60 = arith.constant 0.000000e+00 : f32
    %152 = vector.broadcast %cst_60 : f32 to vector<2x192xf32>
    %153 = arith.maximumf %151, %152 : vector<2x192xf32>
    %c0_61 = arith.constant 0 : index
    %c0_62 = arith.constant 0 : index
    %154 = vector.load %arg18[%c0_61, %c0_62] : memref<192x6xf32, #tpu.memory_space<vmem>>, vector<192x6xf32>
    %cst_63 = arith.constant dense<0.000000e+00> : vector<2x6xf32>
    %155 = tpu.matmul %153, %154, %cst_63 {dimension_numbers = #tpu.dot_dimension_numbers<[1], [0], [0], [1], [0, 0, 1, 1], [], []>} : vector<2x192xf32>, vector<192x6xf32>, vector<2x6xf32> -> vector<2x6xf32>
    %c0_64 = arith.constant 0 : index
    %c0_65 = arith.constant 0 : index
    %156 = vector.load %arg19[%c0_64, %c0_65] : memref<1x6xf32, #tpu.memory_space<vmem>>, vector<1x6xf32>
    %157 = vector.broadcast %156 : vector<1x6xf32> to vector<2x6xf32>
    %158 = arith.addf %155, %157 : vector<2x6xf32>
    %c0_66 = arith.constant 0 : index
    %c0_67 = arith.constant 0 : index
    %159 = vector.load %arg20[%c0_66, %c0_67] : memref<2x6xf32, #tpu.memory_space<vmem>>, vector<2x6xf32>
    tpu.vector_store %arg20[%c0_66, %c0_67], %158 {strides = array<i32>} : memref<2x6xf32, #tpu.memory_space<vmem>>, vector<2x6xf32>,
    return
  }
  func.func @transform_0(%arg0: i32) -> (i32, i32, i32) {
    %c0_i32 = arith.constant 0 : i32
    %c0_i32_0 = arith.constant 0 : i32
    %c0_i32_1 = arith.constant 0 : i32
    return %arg0, %c0_i32, %c0_i32_0 : i32, i32, i32
  }
  func.func @transform_1(%arg0: i32) -> (i32, i32) {
    %c0_i32 = arith.constant 0 : i32
    %c0_i32_0 = arith.constant 0 : i32
    %c0_i32_1 = arith.constant 0 : i32
    return %c0_i32, %c0_i32_0 : i32, i32
  }
  func.func @transform_2(%arg0: i32) -> (i32, i32) {
    %c0_i32 = arith.constant 0 : i32
    %c0_i32_0 = arith.constant 0 : i32
    %c0_i32_1 = arith.constant 0 : i32
    return %c0_i32, %c0_i32_0 : i32, i32
  }
  func.func @transform_3(%arg0: i32) -> (i32, i32) {
    %c0_i32 = arith.constant 0 : i32
    %c0_i32_0 = arith.constant 0 : i32
    %c0_i32_1 = arith.constant 0 : i32
    return %c0_i32, %c0_i32_0 : i32, i32
  }
  func.func @transform_4(%arg0: i32) -> (i32, i32) {
    %c0_i32 = arith.constant 0 : i32
    %c0_i32_0 = arith.constant 0 : i32
    %c0_i32_1 = arith.constant 0 : i32
    return %c0_i32, %c0_i32_0 : i32, i32
  }
  func.func @transform_5(%arg0: i32) -> (i32, i32) {
    %c0_i32 = arith.constant 0 : i32
    %c0_i32_0 = arith.constant 0 : i32
    %c0_i32_1 = arith.constant 0 : i32
    return %c0_i32, %c0_i32_0 : i32, i32
  }
  func.func @transform_6(%arg0: i32) -> (i32, i32) {
    %c0_i32 = arith.constant 0 : i32
    %c0_i32_0 = arith.constant 0 : i32
    %c0_i32_1 = arith.constant 0 : i32
    return %c0_i32, %c0_i32_0 : i32, i32
  }
  func.func @transform_7(%arg0: i32) -> (i32, i32) {
    %c0_i32 = arith.constant 0 : i32
    %c0_i32_0 = arith.constant 0 : i32
    %c0_i32_1 = arith.constant 0 : i32
    return %c0_i32, %c0_i32_0 : i32, i32
  }
  func.func @transform_8(%arg0: i32) -> (i32, i32) {
    %c0_i32 = arith.constant 0 : i32
    %c0_i32_0 = arith.constant 0 : i32
    %c0_i32_1 = arith.constant 0 : i32
    return %c0_i32, %c0_i32_0 : i32, i32
  }
  func.func @transform_9(%arg0: i32) -> (i32, i32) {
    %c0_i32 = arith.constant 0 : i32
    %c0_i32_0 = arith.constant 0 : i32
    %c0_i32_1 = arith.constant 0 : i32
    return %c0_i32, %c0_i32_0 : i32, i32
  }
  func.func @transform_10(%arg0: i32) -> (i32, i32) {
    %c0_i32 = arith.constant 0 : i32
    %c0_i32_0 = arith.constant 0 : i32
    %c0_i32_1 = arith.constant 0 : i32
    return %c0_i32, %c0_i32_0 : i32, i32
  }
  func.func @transform_11(%arg0: i32) -> (i32, i32) {
    %c0_i32 = arith.constant 0 : i32
    %c0_i32_0 = arith.constant 0 : i32
    %c0_i32_1 = arith.constant 0 : i32
    return %c0_i32, %c0_i32_0 : i32, i32
  }
  func.func @transform_12(%arg0: i32) -> (i32, i32) {
    %c0_i32 = arith.constant 0 : i32
    %c0_i32_0 = arith.constant 0 : i32
    %c0_i32_1 = arith.constant 0 : i32
    return %c0_i32, %c0_i32_0 : i32, i32
  }
  func.func @transform_13(%arg0: i32) -> (i32, i32) {
    %c0_i32 = arith.constant 0 : i32
    %c0_i32_0 = arith.constant 0 : i32
    %c0_i32_1 = arith.constant 0 : i32
    return %c0_i32, %c0_i32_0 : i32, i32
  }
  func.func @transform_14(%arg0: i32) -> (i32, i32) {
    %c0_i32 = arith.constant 0 : i32
    %c0_i32_0 = arith.constant 0 : i32
    %c0_i32_1 = arith.constant 0 : i32
    return %c0_i32, %c0_i32_0 : i32, i32
  }
  func.func @transform_15(%arg0: i32) -> (i32, i32) {
    %c0_i32 = arith.constant 0 : i32
    %c0_i32_0 = arith.constant 0 : i32
    %c0_i32_1 = arith.constant 0 : i32
    return %c0_i32, %c0_i32_0 : i32, i32
  }
  func.func @transform_16(%arg0: i32) -> (i32, i32) {
    %c0_i32 = arith.constant 0 : i32
    %c0_i32_0 = arith.constant 0 : i32
    %c0_i32_1 = arith.constant 0 : i32
    return %c0_i32, %c0_i32_0 : i32, i32
  }
  func.func @transform_17(%arg0: i32) -> (i32, i32) {
    %c0_i32 = arith.constant 0 : i32
    %c0_i32_0 = arith.constant 0 : i32
    %c0_i32_1 = arith.constant 0 : i32
    return %c0_i32, %c0_i32_0 : i32, i32
  }
  func.func @transform_18(%arg0: i32) -> (i32, i32) {
    %c0_i32 = arith.constant 0 : i32
    %c0_i32_0 = arith.constant 0 : i32
    %c0_i32_1 = arith.constant 0 : i32
    return %c0_i32, %c0_i32_0 : i32, i32
  }
  func.func @transform_19(%arg0: i32) -> (i32, i32) {
    %c0_i32 = arith.constant 0 : i32
    %c0_i32_0 = arith.constant 0 : i32
    return %arg0, %c0_i32 : i32, i32
  }
}

</mosaic_0001>

<llo_original>
// kernel: flow_reg_clf_forward.1
$region0: #{flow_reg_clf_forward.1}
  #allocation0 [shape = 'u32[]', space=smem, size = 0x4, offset = 0x4, fixed_abs, tag = 'smem constant byte address 0x4 - core index']
  #allocation1 [shape = 'u32[72,128]{1,0:T(1,128)}', space=vmem, size = 0x9000, scoped, tag = 'internal scratch']
  %s0 = inlined_call_operand.vmem [shape: f32[2,79,4], index: 0, kind: input, shape index: {}]
  %s1 = inlined_call_operand.vmem [shape: f32[64,8], index: 1, kind: input, shape index: {}]
  %s2 = inlined_call_operand.vmem [shape: f32[1,8], index: 2, kind: input, shape index: {}]
  %s3 = inlined_call_operand.vmem [shape: f32[64,16], index: 3, kind: input, shape index: {}]
  %s4 = inlined_call_operand.vmem [shape: f32[1,16], index: 4, kind: input, shape index: {}]
  %s5 = inlined_call_operand.vmem [shape: f32[80,32], index: 5, kind: input, shape index: {}]
  %s6 = inlined_call_operand.vmem [shape: f32[1,32], index: 6, kind: input, shape index: {}]
  %s7 = inlined_call_operand.vmem [shape: f32[32,64], index: 7, kind: input, shape index: {}]
  %s8 = inlined_call_operand.vmem [shape: f32[32,64], index: 8, kind: input, shape index: {}]
  %s9 = inlined_call_operand.vmem [shape: f32[12,25], index: 9, kind: input, shape index: {}]
  %s10 = inlined_call_operand.vmem [shape: f32[12,25], index: 10, kind: input, shape index: {}]
  %s11 = inlined_call_operand.vmem [shape: f32[4,8], index: 11, kind: input, shape index: {}]
  %s12 = inlined_call_operand.vmem [shape: f32[4,8], index: 12, kind: input, shape index: {}]
  %s13 = inlined_call_operand.vmem [shape: f32[128,192], index: 13, kind: input, shape index: {}]
  %s14 = inlined_call_operand.vmem [shape: f32[1,192], index: 14, kind: input, shape index: {}]
  %s15 = inlined_call_operand.vmem [shape: f32[192,192], index: 15, kind: input, shape index: {}]
  %s16 = inlined_call_operand.vmem [shape: f32[1,192], index: 16, kind: input, shape index: {}]
  %s17 = inlined_call_operand.vmem [shape: f32[192,6], index: 17, kind: input, shape index: {}]
  %s18 = inlined_call_operand.vmem [shape: f32[1,6], index: 18, kind: input, shape index: {}]
  %s19 = inlined_call_operand.vmem [shape: f32[2,6], index: 19, kind: output, shape index: {}]
  %s20 = sld [smem:[#allocation0]]
  $region86: #{flow_reg_clf_forward.1} parent=0
    _
  %s22 = ssub.s32 1, %s20
  %s23 = scalar_select 0, %s22, %s20
  // Predicated region
  $region2: #{flow_reg_clf_forward.1} parent=0 // pred_check
    _
  $region3: #{flow_reg_clf_forward.1} parent=0 // pred_check_branch
    %25 = sbr.rel (0) target = $region5
  $region4: #{flow_reg_clf_forward.1} parent=0 // pred_region
    _
  $region5: #{flow_reg_clf_forward.1} parent=0 // pred_fallthru
    _
  // Predicated region
  $region6: #{flow_reg_clf_forward.1} parent=0 // pred_check
    _
  $region7: #{flow_reg_clf_forward.1} parent=0 // pred_check_branch
    %27 = sbr.rel (0) target = $region9
  $region8: #{flow_reg_clf_forward.1} parent=0 // pred_region
    _
  $region9: #{flow_reg_clf_forward.1} parent=0 // pred_fallthru
    _
  // Predicated region
  $region10: #{flow_reg_clf_forward.1} parent=0 // pred_check
    _
  $region11: #{flow_reg_clf_forward.1} parent=0 // pred_check_branch
    %29 = sbr.rel (0) target = $region13
  $region12: #{flow_reg_clf_forward.1} parent=0 // pred_region
    _
  $region13: #{flow_reg_clf_forward.1} parent=0 // pred_fallthru
    _
  // Predicated region
  $region14: #{flow_reg_clf_forward.1} parent=0 // pred_check
    _
  $region15: #{flow_reg_clf_forward.1} parent=0 // pred_check_branch
    %31 = sbr.rel (0) target = $region17
  $region16: #{flow_reg_clf_forward.1} parent=0 // pred_region
    _
  $region17: #{flow_reg_clf_forward.1} parent=0 // pred_fallthru
    _
  // Predicated region
  $region18: #{flow_reg_clf_forward.1} parent=0 // pred_check
    _
  $region19: #{flow_reg_clf_forward.1} parent=0 // pred_check_branch
    %33 = sbr.rel (0) target = $region21
  $region20: #{flow_reg_clf_forward.1} parent=0 // pred_region
    _
  $region21: #{flow_reg_clf_forward.1} parent=0 // pred_fallthru
    _
  // Predicated region
  $region22: #{flow_reg_clf_forward.1} parent=0 // pred_check
    _
  $region23: #{flow_reg_clf_forward.1} parent=0 // pred_check_branch
    %35 = sbr.rel (0) target = $region25
  $region24: #{flow_reg_clf_forward.1} parent=0 // pred_region
    _
  $region25: #{flow_reg_clf_forward.1} parent=0 // pred_fallthru
    _
  // Predicated region
  $region26: #{flow_reg_clf_forward.1} parent=0 // pred_check
    _
  $region27: #{flow_reg_clf_forward.1} parent=0 // pred_check_branch
    %37 = sbr.rel (0) target = $region29
  $region28: #{flow_reg_clf_forward.1} parent=0 // pred_region
    _
  $region29: #{flow_reg_clf_forward.1} parent=0 // pred_fallthru
    _
  // Predicated region
  $region30: #{flow_reg_clf_forward.1} parent=0 // pred_check
    _
  $region31: #{flow_reg_clf_forward.1} parent=0 // pred_check_branch
    %39 = sbr.rel (0) target = $region33
  $region32: #{flow_reg_clf_forward.1} parent=0 // pred_region
    _
  $region33: #{flow_reg_clf_forward.1} parent=0 // pred_fallthru
    _
  // Predicated region
  $region34: #{flow_reg_clf_forward.1} parent=0 // pred_check
    _
  $region35: #{flow_reg_clf_forward.1} parent=0 // pred_check_branch
    %41 = sbr.rel (0) target = $region37
  $region36: #{flow_reg_clf_forward.1} parent=0 // pred_region
    _
  $region37: #{flow_reg_clf_forward.1} parent=0 // pred_fallthru
    _
  // Predicated region
  $region38: #{flow_reg_clf_forward.1} parent=0 // pred_check
    _
  $region39: #{flow_reg_clf_forward.1} parent=0 // pred_check_branch
    %43 = sbr.rel (0) target = $region41
  $region40: #{flow_reg_clf_forward.1} parent=0 // pred_region
    _
  $region41: #{flow_reg_clf_forward.1} parent=0 // pred_fallthru
    _
  // Predicated region
  $region42: #{flow_reg_clf_forward.1} parent=0 // pred_check
    _
  $region43: #{flow_reg_clf_forward.1} parent=0 // pred_check_branch
    %45 = sbr.rel (0) target = $region45
  $region44: #{flow_reg_clf_forward.1} parent=0 // pred_region
    _
  $region45: #{flow_reg_clf_forward.1} parent=0 // pred_fallthru
    _
  // Predicated region
  $region46: #{flow_reg_clf_forward.1} parent=0 // pred_check
    _
  $region47: #{flow_reg_clf_forward.1} parent=0 // pred_check_branch
    %47 = sbr.rel (0) target = $region49
  $region48: #{flow_reg_clf_forward.1} parent=0 // pred_region
    _
  $region49: #{flow_reg_clf_forward.1} parent=0 // pred_fallthru
    _
  // Predicated region
  $region50: #{flow_reg_clf_forward.1} parent=0 // pred_check
    _
  $region51: #{flow_reg_clf_forward.1} parent=0 // pred_check_branch
    %49 = sbr.rel (0) target = $region53
  $region52: #{flow_reg_clf_forward.1} parent=0 // pred_region
    _
  $region53: #{flow_reg_clf_forward.1} parent=0 // pred_fallthru
    _
  // Predicated region
  $region54: #{flow_reg_clf_forward.1} parent=0 // pred_check
    _
  $region55: #{flow_reg_clf_forward.1} parent=0 // pred_check_branch
    %51 = sbr.rel (0) target = $region57
  $region56: #{flow_reg_clf_forward.1} parent=0 // pred_region
    _
  $region57: #{flow_reg_clf_forward.1} parent=0 // pred_fallthru
    _
  // Predicated region
  $region58: #{flow_reg_clf_forward.1} parent=0 // pred_check
    _
  $region59: #{flow_reg_clf_forward.1} parent=0 // pred_check_branch
    %53 = sbr.rel (0) target = $region61
  $region60: #{flow_reg_clf_forward.1} parent=0 // pred_region
    _
  $region61: #{flow_reg_clf_forward.1} parent=0 // pred_fallthru
    _
  // Predicated region
  $region62: #{flow_reg_clf_forward.1} parent=0 // pred_check
    _
  $region63: #{flow_reg_clf_forward.1} parent=0 // pred_check_branch
    %55 = sbr.rel (0) target = $region65
  $region64: #{flow_reg_clf_forward.1} parent=0 // pred_region
    _
  $region65: #{flow_reg_clf_forward.1} parent=0 // pred_fallthru
    _
  // Predicated region
  $region66: #{flow_reg_clf_forward.1} parent=0 // pred_check
    _
  $region67: #{flow_reg_clf_forward.1} parent=0 // pred_check_branch
    %57 = sbr.rel (0) target = $region69
  $region68: #{flow_reg_clf_forward.1} parent=0 // pred_region
    _
  $region69: #{flow_reg_clf_forward.1} parent=0 // pred_fallthru
    _
  // Predicated region
  $region70: #{flow_reg_clf_forward.1} parent=0 // pred_check
    _
  $region71: #{flow_reg_clf_forward.1} parent=0 // pred_check_branch
    %59 = sbr.rel (0) target = $region73
  $region72: #{flow_reg_clf_forward.1} parent=0 // pred_region
    _
  $region73: #{flow_reg_clf_forward.1} parent=0 // pred_fallthru
    _
  // Predicated region
  $region74: #{flow_reg_clf_forward.1} parent=0 // pred_check
    _
  $region75: #{flow_reg_clf_forward.1} parent=0 // pred_check_branch
    %61 = sbr.rel (0) target = $region77
  $region76: #{flow_reg_clf_forward.1} parent=0 // pred_region
    _
  $region77: #{flow_reg_clf_forward.1} parent=0 // pred_fallthru
    _
  %v62 = vld [vmem:[%s0] sm:$0xff]
  %v63 = vld [vmem:[%s0 + $0x8] sm:$0xff]
  %v64 = vld [vmem:[%s0 + $0x10] sm:$0xff]
  %v65 = vld [vmem:[%s0 + $0x18] sm:$0xff]
  %v66 = vld [vmem:[%s0 + $0x20] sm:$0xff]
  %v67 = vld [vmem:[%s0 + $0x28] sm:$0xff]
  %v68 = vld [vmem:[%s0 + $0x30] sm:$0xff]
  %v69 = vld [vmem:[%s0 + $0x38] sm:$0xff]
  %v70 = vld [vmem:[%s0 + $0x40] sm:$0xff]
  %v71 = vld [vmem:[%s0 + $0x48] sm:$0x7f]
  %v72 = vld [vmem:[%s0 + $0x50] sm:$0xff]
  %v73 = vld [vmem:[%s0 + $0x58] sm:$0xff]
  %v74 = vld [vmem:[%s0 + $0x60] sm:$0xff]
  %v75 = vld [vmem:[%s0 + $0x68] sm:$0xff]
  %v76 = vld [vmem:[%s0 + $0x70] sm:$0xff]
  %v77 = vld [vmem:[%s0 + $0x78] sm:$0xff]
  %v78 = vld [vmem:[%s0 + $0x80] sm:$0xff]
  %v79 = vld [vmem:[%s0 + $0x88] sm:$0xff]
  %v80 = vld [vmem:[%s0 + $0x90] sm:$0xff]
  %v81 = vld [vmem:[%s0 + $0x98] sm:$0x7f]
  %v82 = vld [vmem:[%s1] sm:$0xff]
  %v83 = vld [vmem:[%s1 + $0x8] sm:$0xff]
  %v84 = vld [vmem:[%s1 + $0x10] sm:$0xff]
  %v85 = vld [vmem:[%s1 + $0x18] sm:$0xff]
  %v86 = vld [vmem:[%s1 + $0x20] sm:$0xff]
  %v87 = vld [vmem:[%s1 + $0x28] sm:$0xff]
  %v88 = vld [vmem:[%s1 + $0x30] sm:$0xff]
  %v89 = vld [vmem:[%s1 + $0x38] sm:$0xff]
  %v90 = vld [vmem:[%s2] sm:$0x1]
  %v91 = vld [vmem:[%s7] sm:$0xff]
  %v92 = vld [vmem:[%s7 + $0x8] sm:$0xff]
  %v93 = vld [vmem:[%s7 + $0x10] sm:$0xff]
  %v94 = vld [vmem:[%s7 + $0x18] sm:$0xff]
  %v95 = vld [vmem:[%s8] sm:$0xff]
  %v96 = vld [vmem:[%s8 + $0x8] sm:$0xff]
  %v97 = vld [vmem:[%s8 + $0x10] sm:$0xff]
  %v98 = vld [vmem:[%s8 + $0x18] sm:$0xff]
  %vm108 = vcmask 1046528
  %v109 = vrot.slane %v62, 1
  %v110 = vrot.slane %v63, 1
  %v111 = vsel %vm108, %v109, %v110
  %v112 = vrot.slane %v64, 1
  %v113 = vsel %vm108, %v110, %v112
  %v114 = vrot.slane %v65, 1
  %v115 = vsel %vm108, %v112, %v114
  %v116 = vrot.slane %v66, 1
  %v117 = vsel %vm108, %v114, %v116
  %v118 = vrot.slane %v67, 1
  %v119 = vsel %vm108, %v116, %v118
  %v120 = vrot.slane %v68, 1
  %v121 = vsel %vm108, %v118, %v120
  %v122 = vrot.slane %v69, 1
  %v123 = vsel %vm108, %v120, %v122
  %v124 = vrot.slane %v70, 1
  %v125 = vsel %vm108, %v122, %v124
  %126 = vrot.lane.b32.xlu0 %v111, 4
  %v127 = vpop.permute.xlu0 %126
  %128 = vrot.lane.b32.xlu0 %v113, 4
  %v129 = vpop.permute.xlu0 %128
  %130 = vrot.lane.b32.xlu0 %v115, 4
  %v131 = vpop.permute.xlu0 %130
  %132 = vrot.lane.b32.xlu0 %v117, 4
  %v133 = vpop.permute.xlu0 %132
  %134 = vrot.lane.b32.xlu0 %v119, 4
  %v135 = vpop.permute.xlu0 %134
  %136 = vrot.lane.b32.xlu0 %v121, 4
  %v137 = vpop.permute.xlu0 %136
  %138 = vrot.lane.b32.xlu0 %v123, 4
  %v139 = vpop.permute.xlu0 %138
  %140 = vrot.lane.b32.xlu0 %v125, 4
  %v141 = vpop.permute.xlu0 %140
  %vm150 = vcmask 1045504
  %v151 = vrot.slane %v62, 2
  %v152 = vrot.slane %v63, 2
  %v153 = vsel %vm150, %v151, %v152
  %v154 = vrot.slane %v64, 2
  %v155 = vsel %vm150, %v152, %v154
  %v156 = vrot.slane %v65, 2
  %v157 = vsel %vm150, %v154, %v156
  %v158 = vrot.slane %v66, 2
  %v159 = vsel %vm150, %v156, %v158
  %v160 = vrot.slane %v67, 2
  %v161 = vsel %vm150, %v158, %v160
  %v162 = vrot.slane %v68, 2
  %v163 = vsel %vm150, %v160, %v162
  %v164 = vrot.slane %v69, 2
  %v165 = vsel %vm150, %v162, %v164
  %v166 = vrot.slane %v70, 2
  %v167 = vsel %vm150, %v164, %v166
  %168 = vrot.lane.b32.xlu0 %v153, 8
  %v169 = vpop.permute.xlu0 %168
  %170 = vrot.lane.b32.xlu0 %v155, 8
  %v171 = vpop.permute.xlu0 %170
  %172 = vrot.lane.b32.xlu0 %v157, 8
  %v173 = vpop.permute.xlu0 %172
  %174 = vrot.lane.b32.xlu0 %v159, 8
  %v175 = vpop.permute.xlu0 %174
  %176 = vrot.lane.b32.xlu0 %v161, 8
  %v177 = vpop.permute.xlu0 %176
  %178 = vrot.lane.b32.xlu0 %v163, 8
  %v179 = vpop.permute.xlu0 %178
  %180 = vrot.lane.b32.xlu0 %v165, 8
  %v181 = vpop.permute.xlu0 %180
  %182 = vrot.lane.b32.xlu0 %v167, 8
  %v183 = vpop.permute.xlu0 %182
  %vm192 = vcmask 1044480
  %v193 = vrot.slane %v62, 3
  %v194 = vrot.slane %v63, 3
  %v195 = vsel %vm192, %v193, %v194
  %v196 = vrot.slane %v64, 3
  %v197 = vsel %vm192, %v194, %v196
  %v198 = vrot.slane %v65, 3
  %v199 = vsel %vm192, %v196, %v198
  %v200 = vrot.slane %v66, 3
  %v201 = vsel %vm192, %v198, %v200
  %v202 = vrot.slane %v67, 3
  %v203 = vsel %vm192, %v200, %v202
  %v204 = vrot.slane %v68, 3
  %v205 = vsel %vm192, %v202, %v204
  %v206 = vrot.slane %v69, 3
  %v207 = vsel %vm192, %v204, %v206
  %v208 = vrot.slane %v70, 3
  %v209 = vsel %vm192, %v206, %v208
  %210 = vrot.lane.b32.xlu0 %v195, 12
  %v211 = vpop.permute.xlu0 %210
  %212 = vrot.lane.b32.xlu0 %v197, 12
  %v213 = vpop.permute.xlu0 %212
  %214 = vrot.lane.b32.xlu0 %v199, 12
  %v215 = vpop.permute.xlu0 %214
  %216 = vrot.lane.b32.xlu0 %v201, 12
  %v217 = vpop.permute.xlu0 %216
  %218 = vrot.lane.b32.xlu0 %v203, 12
  %v219 = vpop.permute.xlu0 %218
  %220 = vrot.lane.b32.xlu0 %v205, 12
  %v221 = vpop.permute.xlu0 %220
  %222 = vrot.lane.b32.xlu0 %v207, 12
  %v223 = vpop.permute.xlu0 %222
  %224 = vrot.lane.b32.xlu0 %v209, 12
  %v225 = vpop.permute.xlu0 %224
  %vm234 = vcmask 1043456
  %v235 = vrot.slane %v62, 4
  %v236 = vrot.slane %v63, 4
  %v237 = vsel %vm234, %v235, %v236
  %v238 = vrot.slane %v64, 4
  %v239 = vsel %vm234, %v236, %v238
  %v240 = vrot.slane %v65, 4
  %v241 = vsel %vm234, %v238, %v240
  %v242 = vrot.slane %v66, 4
  %v243 = vsel %vm234, %v240, %v242
  %v244 = vrot.slane %v67, 4
  %v245 = vsel %vm234, %v242, %v244
  %v246 = vrot.slane %v68, 4
  %v247 = vsel %vm234, %v244, %v246
  %v248 = vrot.slane %v69, 4
  %v249 = vsel %vm234, %v246, %v248
  %v250 = vrot.slane %v70, 4
  %v251 = vsel %vm234, %v248, %v250
  %252 = vrot.lane.b32.xlu0 %v237, 16
  %v253 = vpop.permute.xlu0 %252
  %254 = vrot.lane.b32.xlu0 %v239, 16
  %v255 = vpop.permute.xlu0 %254
  %256 = vrot.lane.b32.xlu0 %v241, 16
  %v257 = vpop.permute.xlu0 %256
  %258 = vrot.lane.b32.xlu0 %v243, 16
  %v259 = vpop.permute.xlu0 %258
  %260 = vrot.lane.b32.xlu0 %v245, 16
  %v261 = vpop.permute.xlu0 %260
  %262 = vrot.lane.b32.xlu0 %v247, 16
  %v263 = vpop.permute.xlu0 %262
  %264 = vrot.lane.b32.xlu0 %v249, 16
  %v265 = vpop.permute.xlu0 %264
  %266 = vrot.lane.b32.xlu0 %v251, 16
  %v267 = vpop.permute.xlu0 %266
  %vm276 = vcmask 1042432
  %v277 = vrot.slane %v62, 5
  %v278 = vrot.slane %v63, 5
  %v279 = vsel %vm276, %v277, %v278
  %v280 = vrot.slane %v64, 5
  %v281 = vsel %vm276, %v278, %v280
  %v282 = vrot.slane %v65, 5
  %v283 = vsel %vm276, %v280, %v282
  %v284 = vrot.slane %v66, 5
  %v285 = vsel %vm276, %v282, %v284
  %v286 = vrot.slane %v67, 5
  %v287 = vsel %vm276, %v284, %v286
  %v288 = vrot.slane %v68, 5
  %v289 = vsel %vm276, %v286, %v288
  %v290 = vrot.slane %v69, 5
  %v291 = vsel %vm276, %v288, %v290
  %v292 = vrot.slane %v70, 5
  %v293 = vsel %vm276, %v290, %v292
  %294 = vrot.lane.b32.xlu0 %v279, 20
  %v295 = vpop.permute.xlu0 %294
  %296 = vrot.lane.b32.xlu0 %v281, 20
  %v297 = vpop.permute.xlu0 %296
  %298 = vrot.lane.b32.xlu0 %v283, 20
  %v299 = vpop.permute.xlu0 %298
  %300 = vrot.lane.b32.xlu0 %v285, 20
  %v301 = vpop.permute.xlu0 %300
  %302 = vrot.lane.b32.xlu0 %v287, 20
  %v303 = vpop.permute.xlu0 %302
  %304 = vrot.lane.b32.xlu0 %v289, 20
  %v305 = vpop.permute.xlu0 %304
  %306 = vrot.lane.b32.xlu0 %v291, 20
  %v307 = vpop.permute.xlu0 %306
  %308 = vrot.lane.b32.xlu0 %v293, 20
  %v309 = vpop.permute.xlu0 %308
  %vm318 = vcmask 1041408
  %v319 = vrot.slane %v62, 6
  %v320 = vrot.slane %v63, 6
  %v321 = vsel %vm318, %v319, %v320
  %v322 = vrot.slane %v64, 6
  %v323 = vsel %vm318, %v320, %v322
  %v324 = vrot.slane %v65, 6
  %v325 = vsel %vm318, %v322, %v324
  %v326 = vrot.slane %v66, 6
  %v327 = vsel %vm318, %v324, %v326
  %v328 = vrot.slane %v67, 6
  %v329 = vsel %vm318, %v326, %v328
  %v330 = vrot.slane %v68, 6
  %v331 = vsel %vm318, %v328, %v330
  %v332 = vrot.slane %v69, 6
  %v333 = vsel %vm318, %v330, %v332
  %v334 = vrot.slane %v70, 6
  %v335 = vsel %vm318, %v332, %v334
  %336 = vrot.lane.b32.xlu0 %v321, 24
  %v337 = vpop.permute.xlu0 %336
  %338 = vrot.lane.b32.xlu0 %v323, 24
  %v339 = vpop.permute.xlu0 %338
  %340 = vrot.lane.b32.xlu0 %v325, 24
  %v341 = vpop.permute.xlu0 %340
  %342 = vrot.lane.b32.xlu0 %v327, 24
  %v343 = vpop.permute.xlu0 %342
  %344 = vrot.lane.b32.xlu0 %v329, 24
  %v345 = vpop.permute.xlu0 %344
  %346 = vrot.lane.b32.xlu0 %v331, 24
  %v347 = vpop.permute.xlu0 %346
  %348 = vrot.lane.b32.xlu0 %v333, 24
  %v349 = vpop.permute.xlu0 %348
  %350 = vrot.lane.b32.xlu0 %v335, 24
  %v351 = vpop.permute.xlu0 %350
  %vm360 = vcmask 1040384
  %v361 = vrot.slane %v62, 7
  %v362 = vrot.slane %v63, 7
  %v363 = vsel %vm360, %v361, %v362
  %v364 = vrot.slane %v64, 7
  %v365 = vsel %vm360, %v362, %v364
  %v366 = vrot.slane %v65, 7
  %v367 = vsel %vm360, %v364, %v366
  %v368 = vrot.slane %v66, 7
  %v369 = vsel %vm360, %v366, %v368
  %v370 = vrot.slane %v67, 7
  %v371 = vsel %vm360, %v368, %v370
  %v372 = vrot.slane %v68, 7
  %v373 = vsel %vm360, %v370, %v372
  %v374 = vrot.slane %v69, 7
  %v375 = vsel %vm360, %v372, %v374
  %v376 = vrot.slane %v70, 7
  %v377 = vsel %vm360, %v374, %v376
  %378 = vrot.lane.b32.xlu0 %v363, 28
  %v379 = vpop.permute.xlu0 %378
  %380 = vrot.lane.b32.xlu0 %v365, 28
  %v381 = vpop.permute.xlu0 %380
  %382 = vrot.lane.b32.xlu0 %v367, 28
  %v383 = vpop.permute.xlu0 %382
  %384 = vrot.lane.b32.xlu0 %v369, 28
  %v385 = vpop.permute.xlu0 %384
  %386 = vrot.lane.b32.xlu0 %v371, 28
  %v387 = vpop.permute.xlu0 %386
  %388 = vrot.lane.b32.xlu0 %v373, 28
  %v389 = vpop.permute.xlu0 %388
  %390 = vrot.lane.b32.xlu0 %v375, 28
  %v391 = vpop.permute.xlu0 %390
  %392 = vrot.lane.b32.xlu0 %v377, 28
  %v393 = vpop.permute.xlu0 %392
  %402 = vrot.lane.b32.xlu0 %v63, 32
  %v403 = vpop.permute.xlu0 %402
  %404 = vrot.lane.b32.xlu0 %v64, 32
  %v405 = vpop.permute.xlu0 %404
  %406 = vrot.lane.b32.xlu0 %v65, 32
  %v407 = vpop.permute.xlu0 %406
  %408 = vrot.lane.b32.xlu0 %v66, 32
  %v409 = vpop.permute.xlu0 %408
  %410 = vrot.lane.b32.xlu0 %v67, 32
  %v411 = vpop.permute.xlu0 %410
  %412 = vrot.lane.b32.xlu0 %v68, 32
  %v413 = vpop.permute.xlu0 %412
  %414 = vrot.lane.b32.xlu0 %v69, 32
  %v415 = vpop.permute.xlu0 %414
  %416 = vrot.lane.b32.xlu0 %v70, 32
  %v417 = vpop.permute.xlu0 %416
  %v427 = vrot.slane %v71, 1
  %v428 = vsel %vm108, %v124, %v427
  %429 = vrot.lane.b32.xlu0 %v113, 36
  %v430 = vpop.permute.xlu0 %429
  %431 = vrot.lane.b32.xlu0 %v115, 36
  %v432 = vpop.permute.xlu0 %431
  %433 = vrot.lane.b32.xlu0 %v117, 36
  %v434 = vpop.permute.xlu0 %433
  %435 = vrot.lane.b32.xlu0 %v119, 36
  %v436 = vpop.permute.xlu0 %435
  %437 = vrot.lane.b32.xlu0 %v121, 36
  %v438 = vpop.permute.xlu0 %437
  %439 = vrot.lane.b32.xlu0 %v123, 36
  %v440 = vpop.permute.xlu0 %439
  %441 = vrot.lane.b32.xlu0 %v125, 36
  %v442 = vpop.permute.xlu0 %441
  %443 = vrot.lane.b32.xlu0 %v428, 36
  %v444 = vpop.permute.xlu0 %443
  %v453 = vrot.slane %v71, 2
  %v454 = vsel %vm150, %v166, %v453
  %455 = vrot.lane.b32.xlu0 %v155, 40
  %v456 = vpop.permute.xlu0 %455
  %457 = vrot.lane.b32.xlu0 %v157, 40
  %v458 = vpop.permute.xlu0 %457
  %459 = vrot.lane.b32.xlu0 %v159, 40
  %v460 = vpop.permute.xlu0 %459
  %461 = vrot.lane.b32.xlu0 %v161, 40
  %v462 = vpop.permute.xlu0 %461
  %463 = vrot.lane.b32.xlu0 %v163, 40
  %v464 = vpop.permute.xlu0 %463
  %465 = vrot.lane.b32.xlu0 %v165, 40
  %v466 = vpop.permute.xlu0 %465
  %467 = vrot.lane.b32.xlu0 %v167, 40
  %v468 = vpop.permute.xlu0 %467
  %469 = vrot.lane.b32.xlu0 %v454, 40
  %v470 = vpop.permute.xlu0 %469
  %v479 = vrot.slane %v71, 3
  %v480 = vsel %vm192, %v208, %v479
  %481 = vrot.lane.b32.xlu0 %v197, 44
  %v482 = vpop.permute.xlu0 %481
  %483 = vrot.lane.b32.xlu0 %v199, 44
  %v484 = vpop.permute.xlu0 %483
  %485 = vrot.lane.b32.xlu0 %v201, 44
  %v486 = vpop.permute.xlu0 %485
  %487 = vrot.lane.b32.xlu0 %v203, 44
  %v488 = vpop.permute.xlu0 %487
  %489 = vrot.lane.b32.xlu0 %v205, 44
  %v490 = vpop.permute.xlu0 %489
  %491 = vrot.lane.b32.xlu0 %v207, 44
  %v492 = vpop.permute.xlu0 %491
  %493 = vrot.lane.b32.xlu0 %v209, 44
  %v494 = vpop.permute.xlu0 %493
  %495 = vrot.lane.b32.xlu0 %v480, 44
  %v496 = vpop.permute.xlu0 %495
  %v505 = vrot.slane %v71, 4
  %v506 = vsel %vm234, %v250, %v505
  %507 = vrot.lane.b32.xlu0 %v239, 48
  %v508 = vpop.permute.xlu0 %507
  %509 = vrot.lane.b32.xlu0 %v241, 48
  %v510 = vpop.permute.xlu0 %509
  %511 = vrot.lane.b32.xlu0 %v243, 48
  %v512 = vpop.permute.xlu0 %511
  %513 = vrot.lane.b32.xlu0 %v245, 48
  %v514 = vpop.permute.xlu0 %513
  %515 = vrot.lane.b32.xlu0 %v247, 48
  %v516 = vpop.permute.xlu0 %515
  %517 = vrot.lane.b32.xlu0 %v249, 48
  %v518 = vpop.permute.xlu0 %517
  %519 = vrot.lane.b32.xlu0 %v251, 48
  %v520 = vpop.permute.xlu0 %519
  %521 = vrot.lane.b32.xlu0 %v506, 48
  %v522 = vpop.permute.xlu0 %521
  %v531 = vrot.slane %v71, 5
  %v532 = vsel %vm276, %v292, %v531
  %533 = vrot.lane.b32.xlu0 %v281, 52
  %v534 = vpop.permute.xlu0 %533
  %535 = vrot.lane.b32.xlu0 %v283, 52
  %v536 = vpop.permute.xlu0 %535
  %537 = vrot.lane.b32.xlu0 %v285, 52
  %v538 = vpop.permute.xlu0 %537
  %539 = vrot.lane.b32.xlu0 %v287, 52
  %v540 = vpop.permute.xlu0 %539
  %541 = vrot.lane.b32.xlu0 %v289, 52
  %v542 = vpop.permute.xlu0 %541
  %543 = vrot.lane.b32.xlu0 %v291, 52
  %v544 = vpop.permute.xlu0 %543
  %545 = vrot.lane.b32.xlu0 %v293, 52
  %v546 = vpop.permute.xlu0 %545
  %547 = vrot.lane.b32.xlu0 %v532, 52
  %v548 = vpop.permute.xlu0 %547
  %v557 = vrot.slane %v71, 6
  %v558 = vsel %vm318, %v334, %v557
  %559 = vrot.lane.b32.xlu0 %v323, 56
  %v560 = vpop.permute.xlu0 %559
  %561 = vrot.lane.b32.xlu0 %v325, 56
  %v562 = vpop.permute.xlu0 %561
  %563 = vrot.lane.b32.xlu0 %v327, 56
  %v564 = vpop.permute.xlu0 %563
  %565 = vrot.lane.b32.xlu0 %v329, 56
  %v566 = vpop.permute.xlu0 %565
  %567 = vrot.lane.b32.xlu0 %v331, 56
  %v568 = vpop.permute.xlu0 %567
  %569 = vrot.lane.b32.xlu0 %v333, 56
  %v570 = vpop.permute.xlu0 %569
  %571 = vrot.lane.b32.xlu0 %v335, 56
  %v572 = vpop.permute.xlu0 %571
  %573 = vrot.lane.b32.xlu0 %v558, 56
  %v574 = vpop.permute.xlu0 %573
  %v583 = vrot.slane %v71, 7
  %v584 = vsel %vm360, %v376, %v583
  %585 = vrot.lane.b32.xlu0 %v365, 60
  %v586 = vpop.permute.xlu0 %585
  %587 = vrot.lane.b32.xlu0 %v367, 60
  %v588 = vpop.permute.xlu0 %587
  %589 = vrot.lane.b32.xlu0 %v369, 60
  %v590 = vpop.permute.xlu0 %589
  %591 = vrot.lane.b32.xlu0 %v371, 60
  %v592 = vpop.permute.xlu0 %591
  %593 = vrot.lane.b32.xlu0 %v373, 60
  %v594 = vpop.permute.xlu0 %593
  %595 = vrot.lane.b32.xlu0 %v375, 60
  %v596 = vpop.permute.xlu0 %595
  %597 = vrot.lane.b32.xlu0 %v377, 60
  %v598 = vpop.permute.xlu0 %597
  %599 = vrot.lane.b32.xlu0 %v584, 60
  %v600 = vpop.permute.xlu0 %599
  %vm609 = vcmask 31744
  %v610 = vsel %vm609, %v62, %v127
  %v611 = vsel %vm609, %v63, %v129
  %v612 = vsel %vm609, %v64, %v131
  %v613 = vsel %vm609, %v65, %v133
  %v614 = vsel %vm609, %v66, %v135
  %v615 = vsel %vm609, %v67, %v137
  %v616 = vsel %vm609, %v68, %v139
  %v617 = vsel %vm609, %v69, %v141
  %vm618 = vcmask 64512
  %v619 = vsel %vm618, %v610, %v169
  %v620 = vsel %vm618, %v611, %v171
  %v621 = vsel %vm618, %v612, %v173
  %v622 = vsel %vm618, %v613, %v175
  %v623 = vsel %vm618, %v614, %v177
  %v624 = vsel %vm618, %v615, %v179
  %v625 = vsel %vm618, %v616, %v181
  %v626 = vsel %vm618, %v617, %v183
  %vm627 = vcmask 97280
  %v628 = vsel %vm627, %v619, %v211
  %v629 = vsel %vm627, %v620, %v213
  %v630 = vsel %vm627, %v621, %v215
  %v631 = vsel %vm627, %v622, %v217
  %v632 = vsel %vm627, %v623, %v219
  %v633 = vsel %vm627, %v624, %v221
  %v634 = vsel %vm627, %v625, %v223
  %v635 = vsel %vm627, %v626, %v225
  %vm636 = vcmask 130048
  %v637 = vsel %vm636, %v628, %v253
  %v638 = vsel %vm636, %v629, %v255
  %v639 = vsel %vm636, %v630, %v257
  %v640 = vsel %vm636, %v631, %v259
  %v641 = vsel %vm636, %v632, %v261
  %v642 = vsel %vm636, %v633, %v263
  %v643 = vsel %vm636, %v634, %v265
  %v644 = vsel %vm636, %v635, %v267
  %vm645 = vcmask 162816
  %v646 = vsel %vm645, %v637, %v295
  %v647 = vsel %vm645, %v638, %v297
  %v648 = vsel %vm645, %v639, %v299
  %v649 = vsel %vm645, %v640, %v301
  %v650 = vsel %vm645, %v641, %v303
  %v651 = vsel %vm645, %v642, %v305
  %v652 = vsel %vm645, %v643, %v307
  %v653 = vsel %vm645, %v644, %v309
  %vm654 = vcmask 195584
  %v655 = vsel %vm654, %v646, %v337
  %v656 = vsel %vm654, %v647, %v339
  %v657 = vsel %vm654, %v648, %v341
  %v658 = vsel %vm654, %v649, %v343
  %v659 = vsel %vm654, %v650, %v345
  %v660 = vsel %vm654, %v651, %v347
  %v661 = vsel %vm654, %v652, %v349
  %v662 = vsel %vm654, %v653, %v351
  %vm663 = vcmask 228352
  %v664 = vsel %vm663, %v655, %v379
  %v665 = vsel %vm663, %v656, %v381
  %v666 = vsel %vm663, %v657, %v383
  %v667 = vsel %vm663, %v658, %v385
  %v668 = vsel %vm663, %v659, %v387
  %v669 = vsel %vm663, %v660, %v389
  %v670 = vsel %vm663, %v661, %v391
  %v671 = vsel %vm663, %v662, %v393
  %vm672 = vcmask 261120
  %v673 = vsel %vm672, %v664, %v403
  %v674 = vsel %vm672, %v665, %v405
  %v675 = vsel %vm672, %v666, %v407
  %v676 = vsel %vm672, %v667, %v409
  %v677 = vsel %vm672, %v668, %v411
  %v678 = vsel %vm672, %v669, %v413
  %v679 = vsel %vm672, %v670, %v415
  %v680 = vsel %vm672, %v671, %v417
  %vm681 = vcmask 293888
  %v682 = vsel %vm681, %v673, %v430
  %v683 = vsel %vm681, %v674, %v432
  %v684 = vsel %vm681, %v675, %v434
  %v685 = vsel %vm681, %v676, %v436
  %v686 = vsel %vm681, %v677, %v438
  %v687 = vsel %vm681, %v678, %v440
  %v688 = vsel %vm681, %v679, %v442
  %v689 = vsel %vm681, %v680, %v444
  %vm690 = vcmask 326656
  %v691 = vsel %vm690, %v682, %v456
  %v692 = vsel %vm690, %v683, %v458
  %v693 = vsel %vm690, %v684, %v460
  %v694 = vsel %vm690, %v685, %v462
  %v695 = vsel %vm690, %v686, %v464
  %v696 = vsel %vm690, %v687, %v466
  %v697 = vsel %vm690, %v688, %v468
  %v698 = vsel %vm690, %v689, %v470
  %vm699 = vcmask 359424
  %v700 = vsel %vm699, %v691, %v482
  %v701 = vsel %vm699, %v692, %v484
  %v702 = vsel %vm699, %v693, %v486
  %v703 = vsel %vm699, %v694, %v488
  %v704 = vsel %vm699, %v695, %v490
  %v705 = vsel %vm699, %v696, %v492
  %v706 = vsel %vm699, %v697, %v494
  %v707 = vsel %vm699, %v698, %v496
  %vm708 = vcmask 392192
  %v709 = vsel %vm708, %v700, %v508
  %v710 = vsel %vm708, %v701, %v510
  %v711 = vsel %vm708, %v702, %v512
  %v712 = vsel %vm708, %v703, %v514
  %v713 = vsel %vm708, %v704, %v516
  %v714 = vsel %vm708, %v705, %v518
  %v715 = vsel %vm708, %v706, %v520
  %v716 = vsel %vm708, %v707, %v522
  %vm717 = vcmask 424960
  %v718 = vsel %vm717, %v709, %v534
  %v719 = vsel %vm717, %v710, %v536
  %v720 = vsel %vm717, %v711, %v538
  %v721 = vsel %vm717, %v712, %v540
  %v722 = vsel %vm717, %v713, %v542
  %v723 = vsel %vm717, %v714, %v544
  %v724 = vsel %vm717, %v715, %v546
  %v725 = vsel %vm717, %v716, %v548
  %vm726 = vcmask 457728
  %v727 = vsel %vm726, %v718, %v560
  %v728 = vsel %vm726, %v719, %v562
  %v729 = vsel %vm726, %v720, %v564
  %v730 = vsel %vm726, %v721, %v566
  %v731 = vsel %vm726, %v722, %v568
  %v732 = vsel %vm726, %v723, %v570
  %v733 = vsel %vm726, %v724, %v572
  %v734 = vsel %vm726, %v725, %v574
  %vm735 = vcmask 490496
  %v736 = vsel %vm735, %v727, %v586
  %v737 = vsel %vm735, %v728, %v588
  %v738 = vsel %vm735, %v729, %v590
  %v739 = vsel %vm735, %v730, %v592
  %v740 = vsel %vm735, %v731, %v594
  %v741 = vsel %vm735, %v732, %v596
  %v742 = vsel %vm735, %v733, %v598
  %v743 = vsel %vm735, %v734, %v600
  %v745 = vperm.slane %v90, 0
  %vm747 = vcmask 523264
  %v749 = vsel %vm747, %v736, 0
  %v752 = vsel %vm747, %v737, 0
  %v755 = vsel %vm747, %v738, 0
  %v758 = vsel %vm747, %v739, 0
  %v761 = vsel %vm747, %v740, 0
  %v764 = vsel %vm747, %v741, 0
  %v767 = vsel %vm747, %v742, 0
  %v770 = vsel %vm747, %v743, 0
  %772 = vmatpush.msra.mxu0 0.0
  %773 = vmatpush.msra.mxu0 0.0
  %774 = vmatpush.msra.mxu0 0.0
  %775 = vmatpush.msra.mxu0 0.0
  %776 = vmatpush.msra.mxu0 0.0
  %777 = vmatpush.msra.mxu0 0.0
  %778 = vmatpush.msra.mxu0 0.0
  %779 = vmatpush.msra.mxu0 0.0
  %780 = vmatpush.msra.mxu0 %v89
  %781 = vmatpush.msra.mxu0 %v88
  %782 = vmatpush.msra.mxu0 %v87
  %783 = vmatpush.msra.mxu0 %v86
  %784 = vmatpush.msra.mxu0 %v85
  %785 = vmatpush.msra.mxu0 %v84
  %786 = vmatpush.msra.mxu0 %v83
  %787 = vmatpush.msra.mxu0 %v82
  %788 = vmatmul.f32.gmra.mxu0 %v749
  %v789 = vpop.f32.mrf.mxu0
  %v790 = vadd.f32 %v745, %v789
  %791 = vmatmul.f32.gmra.mxu0 %v752
  %v792 = vpop.f32.mrf.mxu0
  %v793 = vadd.f32 %v745, %v792
  %794 = vmatmul.f32.gmra.mxu0 %v755
  %v795 = vpop.f32.mrf.mxu0
  %v796 = vadd.f32 %v745, %v795
  %797 = vmatmul.f32.gmra.mxu0 %v758
  %v798 = vpop.f32.mrf.mxu0
  %v799 = vadd.f32 %v745, %v798
  %800 = vmatmul.f32.gmra.mxu0 %v761
  %v801 = vpop.f32.mrf.mxu0
  %v802 = vadd.f32 %v745, %v801
  %803 = vmatmul.f32.gmra.mxu0 %v764
  %v804 = vpop.f32.mrf.mxu0
  %v805 = vadd.f32 %v745, %v804
  %806 = vmatmul.f32.gmra.mxu0 %v767
  %v807 = vpop.f32.mrf.mxu0
  %v808 = vadd.f32 %v745, %v807
  %809 = vmatmul.f32.gmra.mxu0 %v770
  %v810 = vpop.f32.mrf.mxu0
  %v811 = vadd.f32 %v745, %v810
  %812 = vdwg.mxu0
  %v813 = vmax.f32 %v790, 0.0
  %v814 = vmax.f32 %v793, 0.0
  %v815 = vmax.f32 %v796, 0.0
  %v816 = vmax.f32 %v799, 0.0
  %v817 = vmax.f32 %v802, 0.0
  %v818 = vmax.f32 %v805, 0.0
  %v819 = vmax.f32 %v808, 0.0
  %v820 = vmax.f32 %v811, 0.0
  %v822 = vsel %vm747, %v91, 0
  %v825 = vsel %vm747, %v92, 0
  %v828 = vsel %vm747, %v93, 0
  %v831 = vsel %vm747, %v94, 0
  %833 = vmatpush.msra.mxu0 0.0
  %834 = vmatpush.msra.mxu0 0.0
  %835 = vmatpush.msra.mxu0 0.0
  %836 = vmatpush.msra.mxu0 0.0
  %837 = vmatpush.msra.mxu0 0.0
  %838 = vmatpush.msra.mxu0 0.0
  %839 = vmatpush.msra.mxu0 0.0
  %840 = vmatpush.msra.mxu0 0.0
  %841 = vmatpush.msra.mxu0 %v820
  %842 = vmatpush.msra.mxu0 %v819
  %843 = vmatpush.msra.mxu0 %v818
  %844 = vmatpush.msra.mxu0 %v817
  %845 = vmatpush.msra.mxu0 %v816
  %846 = vmatpush.msra.mxu0 %v815
  %847 = vmatpush.msra.mxu0 %v814
  %848 = vmatpush.msra.mxu0 %v813
  %849 = vmatmul.f32.gmra.mxu0 %v822
  %v850 = vpop.f32.mrf.mxu0
  %v851 = vadd.f32 0.0, %v850
  %852 = vmatmul.f32.gmra.mxu0 %v825
  %v853 = vpop.f32.mrf.mxu0
  %v854 = vadd.f32 0.0, %v853
  %855 = vmatmul.f32.gmra.mxu0 %v828
  %v856 = vpop.f32.mrf.mxu0
  %v857 = vadd.f32 0.0, %v856
  %858 = vmatmul.f32.gmra.mxu0 %v831
  %v859 = vpop.f32.mrf.mxu0
  %v860 = vadd.f32 0.0, %v859
  %861 = vdwg.mxu0
  %v863 = vsel %vm747, %v95, 0
  %v866 = vsel %vm747, %v96, 0
  %v869 = vsel %vm747, %v97, 0
  %v872 = vsel %vm747, %v98, 0
  %874 = vmatpush.msra.mxu0 0.0
  %875 = vmatpush.msra.mxu0 0.0
  %876 = vmatpush.msra.mxu0 0.0
  %877 = vmatpush.msra.mxu0 0.0
  %878 = vmatpush.msra.mxu0 0.0
  %879 = vmatpush.msra.mxu0 0.0
  %880 = vmatpush.msra.mxu0 0.0
  %881 = vmatpush.msra.mxu0 0.0
  %882 = vmatpush.msra.mxu0 %v820
  %883 = vmatpush.msra.mxu0 %v819
  %884 = vmatpush.msra.mxu0 %v818
  %885 = vmatpush.msra.mxu0 %v817
  %886 = vmatpush.msra.mxu0 %v816
  %887 = vmatpush.msra.mxu0 %v815
  %888 = vmatpush.msra.mxu0 %v814
  %889 = vmatpush.msra.mxu0 %v813
  %890 = vmatmul.f32.gmra.mxu0 %v863
  %v891 = vpop.f32.mrf.mxu0
  %v892 = vadd.f32 0.0, %v891
  %893 = vmatmul.f32.gmra.mxu0 %v866
  %v894 = vpop.f32.mrf.mxu0
  %v895 = vadd.f32 0.0, %v894
  %896 = vmatmul.f32.gmra.mxu0 %v869
  %v897 = vpop.f32.mrf.mxu0
  %v898 = vadd.f32 0.0, %v897
  %899 = vmatmul.f32.gmra.mxu0 %v872
  %v900 = vpop.f32.mrf.mxu0
  %v901 = vadd.f32 0.0, %v900
  %902 = vdwg.mxu0
  %v903 = vmax.f32 %v851, %v892
  %v904 = vmax.f32 %v854, %v895
  %v905 = vmax.f32 %v857, %v898
  %v906 = vmax.f32 %v860, %v901
  %v916 = vrot.slane %v72, 1
  %v917 = vrot.slane %v73, 1
  %v918 = vsel %vm108, %v916, %v917
  %v919 = vrot.slane %v74, 1
  %v920 = vsel %vm108, %v917, %v919
  %v921 = vrot.slane %v75, 1
  %v922 = vsel %vm108, %v919, %v921
  %v923 = vrot.slane %v76, 1
  %v924 = vsel %vm108, %v921, %v923
  %v925 = vrot.slane %v77, 1
  %v926 = vsel %vm108, %v923, %v925
  %v927 = vrot.slane %v78, 1
  %v928 = vsel %vm108, %v925, %v927
  %v929 = vrot.slane %v79, 1
  %v930 = vsel %vm108, %v927, %v929
  %v931 = vrot.slane %v80, 1
  %v932 = vsel %vm108, %v929, %v931
  %933 = vrot.lane.b32.xlu0 %v918, 4
  %v934 = vpop.permute.xlu0 %933
  %935 = vrot.lane.b32.xlu0 %v920, 4
  %v936 = vpop.permute.xlu0 %935
  %937 = vrot.lane.b32.xlu0 %v922, 4
  %v938 = vpop.permute.xlu0 %937
  %939 = vrot.lane.b32.xlu0 %v924, 4
  %v940 = vpop.permute.xlu0 %939
  %941 = vrot.lane.b32.xlu0 %v926, 4
  %v942 = vpop.permute.xlu0 %941
  %943 = vrot.lane.b32.xlu0 %v928, 4
  %v944 = vpop.permute.xlu0 %943
  %945 = vrot.lane.b32.xlu0 %v930, 4
  %v946 = vpop.permute.xlu0 %945
  %947 = vrot.lane.b32.xlu0 %v932, 4
  %v948 = vpop.permute.xlu0 %947
  %v957 = vrot.slane %v72, 2
  %v958 = vrot.slane %v73, 2
  %v959 = vsel %vm150, %v957, %v958
  %v960 = vrot.slane %v74, 2
  %v961 = vsel %vm150, %v958, %v960
  %v962 = vrot.slane %v75, 2
  %v963 = vsel %vm150, %v960, %v962
  %v964 = vrot.slane %v76, 2
  %v965 = vsel %vm150, %v962, %v964
  %v966 = vrot.slane %v77, 2
  %v967 = vsel %vm150, %v964, %v966
  %v968 = vrot.slane %v78, 2
  %v969 = vsel %vm150, %v966, %v968
  %v970 = vrot.slane %v79, 2
  %v971 = vsel %vm150, %v968, %v970
  %v972 = vrot.slane %v80, 2
  %v973 = vsel %vm150, %v970, %v972
  %974 = vrot.lane.b32.xlu0 %v959, 8
  %v975 = vpop.permute.xlu0 %974
  %976 = vrot.lane.b32.xlu0 %v961, 8
  %v977 = vpop.permute.xlu0 %976
  %978 = vrot.lane.b32.xlu0 %v963, 8
  %v979 = vpop.permute.xlu0 %978
  %980 = vrot.lane.b32.xlu0 %v965, 8
  %v981 = vpop.permute.xlu0 %980
  %982 = vrot.lane.b32.xlu0 %v967, 8
  %v983 = vpop.permute.xlu0 %982
  %984 = vrot.lane.b32.xlu0 %v969, 8
  %v985 = vpop.permute.xlu0 %984
  %986 = vrot.lane.b32.xlu0 %v971, 8
  %v987 = vpop.permute.xlu0 %986
  %988 = vrot.lane.b32.xlu0 %v973, 8
  %v989 = vpop.permute.xlu0 %988
  %v998 = vrot.slane %v72, 3
  %v999 = vrot.slane %v73, 3
  %v1000 = vsel %vm192, %v998, %v999
  %v1001 = vrot.slane %v74, 3
  %v1002 = vsel %vm192, %v999, %v1001
  %v1003 = vrot.slane %v75, 3
  %v1004 = vsel %vm192, %v1001, %v1003
  %v1005 = vrot.slane %v76, 3
  %v1006 = vsel %vm192, %v1003, %v1005
  %v1007 = vrot.slane %v77, 3
  %v1008 = vsel %vm192, %v1005, %v1007
  %v1009 = vrot.slane %v78, 3
  %v1010 = vsel %vm192, %v1007, %v1009
  %v1011 = vrot.slane %v79, 3
  %v1012 = vsel %vm192, %v1009, %v1011
  %v1013 = vrot.slane %v80, 3
  %v1014 = vsel %vm192, %v1011, %v1013
  %1015 = vrot.lane.b32.xlu0 %v1000, 12
  %v1016 = vpop.permute.xlu0 %1015
  %1017 = vrot.lane.b32.xlu0 %v1002, 12
  %v1018 = vpop.permute.xlu0 %1017
  %1019 = vrot.lane.b32.xlu0 %v1004, 12
  %v1020 = vpop.permute.xlu0 %1019
  %1021 = vrot.lane.b32.xlu0 %v1006, 12
  %v1022 = vpop.permute.xlu0 %1021
  %1023 = vrot.lane.b32.xlu0 %v1008, 12
  %v1024 = vpop.permute.xlu0 %1023
  %1025 = vrot.lane.b32.xlu0 %v1010, 12
  %v1026 = vpop.permute.xlu0 %1025
  %1027 = vrot.lane.b32.xlu0 %v1012, 12
  %v1028 = vpop.permute.xlu0 %1027
  %1029 = vrot.lane.b32.xlu0 %v1014, 12
  %v1030 = vpop.permute.xlu0 %1029
  %v1039 = vrot.slane %v72, 4
  %v1040 = vrot.slane %v73, 4
  %v1041 = vsel %vm234, %v1039, %v1040
  %v1042 = vrot.slane %v74, 4
  %v1043 = vsel %vm234, %v1040, %v1042
  %v1044 = vrot.slane %v75, 4
  %v1045 = vsel %vm234, %v1042, %v1044
  %v1046 = vrot.slane %v76, 4
  %v1047 = vsel %vm234, %v1044, %v1046
  %v1048 = vrot.slane %v77, 4
  %v1049 = vsel %vm234, %v1046, %v1048
  %v1050 = vrot.slane %v78, 4
  %v1051 = vsel %vm234, %v1048, %v1050
  %v1052 = vrot.slane %v79, 4
  %v1053 = vsel %vm234, %v1050, %v1052
  %v1054 = vrot.slane %v80, 4
  %v1055 = vsel %vm234, %v1052, %v1054
  %1056 = vrot.lane.b32.xlu0 %v1041, 16
  %v1057 = vpop.permute.xlu0 %1056
  %1058 = vrot.lane.b32.xlu0 %v1043, 16
  %v1059 = vpop.permute.xlu0 %1058
  %1060 = vrot.lane.b32.xlu0 %v1045, 16
  %v1061 = vpop.permute.xlu0 %1060
  %1062 = vrot.lane.b32.xlu0 %v1047, 16
  %v1063 = vpop.permute.xlu0 %1062
  %1064 = vrot.lane.b32.xlu0 %v1049, 16
  %v1065 = vpop.permute.xlu0 %1064
  %1066 = vrot.lane.b32.xlu0 %v1051, 16
  %v1067 = vpop.permute.xlu0 %1066
  %1068 = vrot.lane.b32.xlu0 %v1053, 16
  %v1069 = vpop.permute.xlu0 %1068
  %1070 = vrot.lane.b32.xlu0 %v1055, 16
  %v1071 = vpop.permute.xlu0 %1070
  %v1080 = vrot.slane %v72, 5
  %v1081 = vrot.slane %v73, 5
  %v1082 = vsel %vm276, %v1080, %v1081
  %v1083 = vrot.slane %v74, 5
  %v1084 = vsel %vm276, %v1081, %v1083
  %v1085 = vrot.slane %v75, 5
  %v1086 = vsel %vm276, %v1083, %v1085
  %v1087 = vrot.slane %v76, 5
  %v1088 = vsel %vm276, %v1085, %v1087
  %v1089 = vrot.slane %v77, 5
  %v1090 = vsel %vm276, %v1087, %v1089
  %v1091 = vrot.slane %v78, 5
  %v1092 = vsel %vm276, %v1089, %v1091
  %v1093 = vrot.slane %v79, 5
  %v1094 = vsel %vm276, %v1091, %v1093
  %v1095 = vrot.slane %v80, 5
  %v1096 = vsel %vm276, %v1093, %v1095
  %1097 = vrot.lane.b32.xlu0 %v1082, 20
  %v1098 = vpop.permute.xlu0 %1097
  %1099 = vrot.lane.b32.xlu0 %v1084, 20
  %v1100 = vpop.permute.xlu0 %1099
  %1101 = vrot.lane.b32.xlu0 %v1086, 20
  %v1102 = vpop.permute.xlu0 %1101
  %1103 = vrot.lane.b32.xlu0 %v1088, 20
  %v1104 = vpop.permute.xlu0 %1103
  %1105 = vrot.lane.b32.xlu0 %v1090, 20
  %v1106 = vpop.permute.xlu0 %1105
  %1107 = vrot.lane.b32.xlu0 %v1092, 20
  %v1108 = vpop.permute.xlu0 %1107
  %1109 = vrot.lane.b32.xlu0 %v1094, 20
  %v1110 = vpop.permute.xlu0 %1109
  %1111 = vrot.lane.b32.xlu0 %v1096, 20
  %v1112 = vpop.permute.xlu0 %1111
  %v1121 = vrot.slane %v72, 6
  %v1122 = vrot.slane %v73, 6
  %v1123 = vsel %vm318, %v1121, %v1122
  %v1124 = vrot.slane %v74, 6
  %v1125 = vsel %vm318, %v1122, %v1124
  %v1126 = vrot.slane %v75, 6
  %v1127 = vsel %vm318, %v1124, %v1126
  %v1128 = vrot.slane %v76, 6
  %v1129 = vsel %vm318, %v1126, %v1128
  %v1130 = vrot.slane %v77, 6
  %v1131 = vsel %vm318, %v1128, %v1130
  %v1132 = vrot.slane %v78, 6
  %v1133 = vsel %vm318, %v1130, %v1132
  %v1134 = vrot.slane %v79, 6
  %v1135 = vsel %vm318, %v1132, %v1134
  %v1136 = vrot.slane %v80, 6
  %v1137 = vsel %vm318, %v1134, %v1136
  %1138 = vrot.lane.b32.xlu0 %v1123, 24
  %v1139 = vpop.permute.xlu0 %1138
  %1140 = vrot.lane.b32.xlu0 %v1125, 24
  %v1141 = vpop.permute.xlu0 %1140
  %1142 = vrot.lane.b32.xlu0 %v1127, 24
  %v1143 = vpop.permute.xlu0 %1142
  %1144 = vrot.lane.b32.xlu0 %v1129, 24
  %v1145 = vpop.permute.xlu0 %1144
  %1146 = vrot.lane.b32.xlu0 %v1131, 24
  %v1147 = vpop.permute.xlu0 %1146
  %1148 = vrot.lane.b32.xlu0 %v1133, 24
  %v1149 = vpop.permute.xlu0 %1148
  %1150 = vrot.lane.b32.xlu0 %v1135, 24
  %v1151 = vpop.permute.xlu0 %1150
  %1152 = vrot.lane.b32.xlu0 %v1137, 24
  %v1153 = vpop.permute.xlu0 %1152
  %v1162 = vrot.slane %v72, 7
  %v1163 = vrot.slane %v73, 7
  %v1164 = vsel %vm360, %v1162, %v1163
  %v1165 = vrot.slane %v74, 7
  %v1166 = vsel %vm360, %v1163, %v1165
  %v1167 = vrot.slane %v75, 7
  %v1168 = vsel %vm360, %v1165, %v1167
  %v1169 = vrot.slane %v76, 7
  %v1170 = vsel %vm360, %v1167, %v1169
  %v1171 = vrot.slane %v77, 7
  %v1172 = vsel %vm360, %v1169, %v1171
  %v1173 = vrot.slane %v78, 7
  %v1174 = vsel %vm360, %v1171, %v1173
  %v1175 = vrot.slane %v79, 7
  %v1176 = vsel %vm360, %v1173, %v1175
  %v1177 = vrot.slane %v80, 7
  %v1178 = vsel %vm360, %v1175, %v1177
  %1179 = vrot.lane.b32.xlu0 %v1164, 28
  %v1180 = vpop.permute.xlu0 %1179
  %1181 = vrot.lane.b32.xlu0 %v1166, 28
  %v1182 = vpop.permute.xlu0 %1181
  %1183 = vrot.lane.b32.xlu0 %v1168, 28
  %v1184 = vpop.permute.xlu0 %1183
  %1185 = vrot.lane.b32.xlu0 %v1170, 28
  %v1186 = vpop.permute.xlu0 %1185
  %1187 = vrot.lane.b32.xlu0 %v1172, 28
  %v1188 = vpop.permute.xlu0 %1187
  %1189 = vrot.lane.b32.xlu0 %v1174, 28
  %v1190 = vpop.permute.xlu0 %1189
  %1191 = vrot.lane.b32.xlu0 %v1176, 28
  %v1192 = vpop.permute.xlu0 %1191
  %1193 = vrot.lane.b32.xlu0 %v1178, 28
  %v1194 = vpop.permute.xlu0 %1193
  %1203 = vrot.lane.b32.xlu0 %v73, 32
  %v1204 = vpop.permute.xlu0 %1203
  %1205 = vrot.lane.b32.xlu0 %v74, 32
  %v1206 = vpop.permute.xlu0 %1205
  %1207 = vrot.lane.b32.xlu0 %v75, 32
  %v1208 = vpop.permute.xlu0 %1207
  %1209 = vrot.lane.b32.xlu0 %v76, 32
  %v1210 = vpop.permute.xlu0 %1209
  %1211 = vrot.lane.b32.xlu0 %v77, 32
  %v1212 = vpop.permute.xlu0 %1211
  %1213 = vrot.lane.b32.xlu0 %v78, 32
  %v1214 = vpop.permute.xlu0 %1213
  %1215 = vrot.lane.b32.xlu0 %v79, 32
  %v1216 = vpop.permute.xlu0 %1215
  %1217 = vrot.lane.b32.xlu0 %v80, 32
  %v1218 = vpop.permute.xlu0 %1217
  %v1228 = vrot.slane %v81, 1
  %v1229 = vsel %vm108, %v931, %v1228
  %1230 = vrot.lane.b32.xlu0 %v920, 36
  %v1231 = vpop.permute.xlu0 %1230
  %1232 = vrot.lane.b32.xlu0 %v922, 36
  %v1233 = vpop.permute.xlu0 %1232
  %1234 = vrot.lane.b32.xlu0 %v924, 36
  %v1235 = vpop.permute.xlu0 %1234
  %1236 = vrot.lane.b32.xlu0 %v926, 36
  %v1237 = vpop.permute.xlu0 %1236
  %1238 = vrot.lane.b32.xlu0 %v928, 36
  %v1239 = vpop.permute.xlu0 %1238
  %1240 = vrot.lane.b32.xlu0 %v930, 36
  %v1241 = vpop.permute.xlu0 %1240
  %1242 = vrot.lane.b32.xlu0 %v932, 36
  %v1243 = vpop.permute.xlu0 %1242
  %1244 = vrot.lane.b32.xlu0 %v1229, 36
  %v1245 = vpop.permute.xlu0 %1244
  %v1254 = vrot.slane %v81, 2
  %v1255 = vsel %vm150, %v972, %v1254
  %1256 = vrot.lane.b32.xlu0 %v961, 40
  %v1257 = vpop.permute.xlu0 %1256
  %1258 = vrot.lane.b32.xlu0 %v963, 40
  %v1259 = vpop.permute.xlu0 %1258
  %1260 = vrot.lane.b32.xlu0 %v965, 40
  %v1261 = vpop.permute.xlu0 %1260
  %1262 = vrot.lane.b32.xlu0 %v967, 40
  %v1263 = vpop.permute.xlu0 %1262
  %1264 = vrot.lane.b32.xlu0 %v969, 40
  %v1265 = vpop.permute.xlu0 %1264
  %1266 = vrot.lane.b32.xlu0 %v971, 40
  %v1267 = vpop.permute.xlu0 %1266
  %1268 = vrot.lane.b32.xlu0 %v973, 40
  %v1269 = vpop.permute.xlu0 %1268
  %1270 = vrot.lane.b32.xlu0 %v1255, 40
  %v1271 = vpop.permute.xlu0 %1270
  %v1280 = vrot.slane %v81, 3
  %v1281 = vsel %vm192, %v1013, %v1280
  %1282 = vrot.lane.b32.xlu0 %v1002, 44
  %v1283 = vpop.permute.xlu0 %1282
  %1284 = vrot.lane.b32.xlu0 %v1004, 44
  %v1285 = vpop.permute.xlu0 %1284
  %1286 = vrot.lane.b32.xlu0 %v1006, 44
  %v1287 = vpop.permute.xlu0 %1286
  %1288 = vrot.lane.b32.xlu0 %v1008, 44
  %v1289 = vpop.permute.xlu0 %1288
  %1290 = vrot.lane.b32.xlu0 %v1010, 44
  %v1291 = vpop.permute.xlu0 %1290
  %1292 = vrot.lane.b32.xlu0 %v1012, 44
  %v1293 = vpop.permute.xlu0 %1292
  %1294 = vrot.lane.b32.xlu0 %v1014, 44
  %v1295 = vpop.permute.xlu0 %1294
  %1296 = vrot.lane.b32.xlu0 %v1281, 44
  %v1297 = vpop.permute.xlu0 %1296
  %v1306 = vrot.slane %v81, 4
  %v1307 = vsel %vm234, %v1054, %v1306
  %1308 = vrot.lane.b32.xlu0 %v1043, 48
  %v1309 = vpop.permute.xlu0 %1308
  %1310 = vrot.lane.b32.xlu0 %v1045, 48
  %v1311 = vpop.permute.xlu0 %1310
  %1312 = vrot.lane.b32.xlu0 %v1047, 48
  %v1313 = vpop.permute.xlu0 %1312
  %1314 = vrot.lane.b32.xlu0 %v1049, 48
  %v1315 = vpop.permute.xlu0 %1314
  %1316 = vrot.lane.b32.xlu0 %v1051, 48
  %v1317 = vpop.permute.xlu0 %1316
  %1318 = vrot.lane.b32.xlu0 %v1053, 48
  %v1319 = vpop.permute.xlu0 %1318
  %1320 = vrot.lane.b32.xlu0 %v1055, 48
  %v1321 = vpop.permute.xlu0 %1320
  %1322 = vrot.lane.b32.xlu0 %v1307, 48
  %v1323 = vpop.permute.xlu0 %1322
  %v1332 = vrot.slane %v81, 5
  %v1333 = vsel %vm276, %v1095, %v1332
  %1334 = vrot.lane.b32.xlu0 %v1084, 52
  %v1335 = vpop.permute.xlu0 %1334
  %1336 = vrot.lane.b32.xlu0 %v1086, 52
  %v1337 = vpop.permute.xlu0 %1336
  %1338 = vrot.lane.b32.xlu0 %v1088, 52
  %v1339 = vpop.permute.xlu0 %1338
  %1340 = vrot.lane.b32.xlu0 %v1090, 52
  %v1341 = vpop.permute.xlu0 %1340
  %1342 = vrot.lane.b32.xlu0 %v1092, 52
  %v1343 = vpop.permute.xlu0 %1342
  %1344 = vrot.lane.b32.xlu0 %v1094, 52
  %v1345 = vpop.permute.xlu0 %1344
  %1346 = vrot.lane.b32.xlu0 %v1096, 52
  %v1347 = vpop.permute.xlu0 %1346
  %1348 = vrot.lane.b32.xlu0 %v1333, 52
  %v1349 = vpop.permute.xlu0 %1348
  %v1358 = vrot.slane %v81, 6
  %v1359 = vsel %vm318, %v1136, %v1358
  %1360 = vrot.lane.b32.xlu0 %v1125, 56
  %v1361 = vpop.permute.xlu0 %1360
  %1362 = vrot.lane.b32.xlu0 %v1127, 56
  %v1363 = vpop.permute.xlu0 %1362
  %1364 = vrot.lane.b32.xlu0 %v1129, 56
  %v1365 = vpop.permute.xlu0 %1364
  %1366 = vrot.lane.b32.xlu0 %v1131, 56
  %v1367 = vpop.permute.xlu0 %1366
  %1368 = vrot.lane.b32.xlu0 %v1133, 56
  %v1369 = vpop.permute.xlu0 %1368
  %1370 = vrot.lane.b32.xlu0 %v1135, 56
  %v1371 = vpop.permute.xlu0 %1370
  %1372 = vrot.lane.b32.xlu0 %v1137, 56
  %v1373 = vpop.permute.xlu0 %1372
  %1374 = vrot.lane.b32.xlu0 %v1359, 56
  %v1375 = vpop.permute.xlu0 %1374
  %v1384 = vrot.slane %v81, 7
  %v1385 = vsel %vm360, %v1177, %v1384
  %1386 = vrot.lane.b32.xlu0 %v1166, 60
  %v1387 = vpop.permute.xlu0 %1386
  %1388 = vrot.lane.b32.xlu0 %v1168, 60
  %v1389 = vpop.permute.xlu0 %1388
  %1390 = vrot.lane.b32.xlu0 %v1170, 60
  %v1391 = vpop.permute.xlu0 %1390
  %1392 = vrot.lane.b32.xlu0 %v1172, 60
  %v1393 = vpop.permute.xlu0 %1392
  %1394 = vrot.lane.b32.xlu0 %v1174, 60
  %v1395 = vpop.permute.xlu0 %1394
  %1396 = vrot.lane.b32.xlu0 %v1176, 60
  %v1397 = vpop.permute.xlu0 %1396
  %1398 = vrot.lane.b32.xlu0 %v1178, 60
  %v1399 = vpop.permute.xlu0 %1398
  %1400 = vrot.lane.b32.xlu0 %v1385, 60
  %v1401 = vpop.permute.xlu0 %1400
  %v1410 = vsel %vm609, %v72, %v934
  %v1411 = vsel %vm609, %v73, %v936
  %v1412 = vsel %vm609, %v74, %v938
  %v1413 = vsel %vm609, %v75, %v940
  %v1414 = vsel %vm609, %v76, %v942
  %v1415 = vsel %vm609, %v77, %v944
  %v1416 = vsel %vm609, %v78, %v946
  %v1417 = vsel %vm609, %v79, %v948
  %v1418 = vsel %vm618, %v1410, %v975
  %v1419 = vsel %vm618, %v1411, %v977
  %v1420 = vsel %vm618, %v1412, %v979
  %v1421 = vsel %vm618, %v1413, %v981
  %v1422 = vsel %vm618, %v1414, %v983
  %v1423 = vsel %vm618, %v1415, %v985
  %v1424 = vsel %vm618, %v1416, %v987
  %v1425 = vsel %vm618, %v1417, %v989
  %v1426 = vsel %vm627, %v1418, %v1016
  %v1427 = vsel %vm627, %v1419, %v1018
  %v1428 = vsel %vm627, %v1420, %v1020
  %v1429 = vsel %vm627, %v1421, %v1022
  %v1430 = vsel %vm627, %v1422, %v1024
  %v1431 = vsel %vm627, %v1423, %v1026
  %v1432 = vsel %vm627, %v1424, %v1028
  %v1433 = vsel %vm627, %v1425, %v1030
  %v1434 = vsel %vm636, %v1426, %v1057
  %v1435 = vsel %vm636, %v1427, %v1059
  %v1436 = vsel %vm636, %v1428, %v1061
  %v1437 = vsel %vm636, %v1429, %v1063
  %v1438 = vsel %vm636, %v1430, %v1065
  %v1439 = vsel %vm636, %v1431, %v1067
  %v1440 = vsel %vm636, %v1432, %v1069
  %v1441 = vsel %vm636, %v1433, %v1071
  %v1442 = vsel %vm645, %v1434, %v1098
  %v1443 = vsel %vm645, %v1435, %v1100
  %v1444 = vsel %vm645, %v1436, %v1102
  %v1445 = vsel %vm645, %v1437, %v1104
  %v1446 = vsel %vm645, %v1438, %v1106
  %v1447 = vsel %vm645, %v1439, %v1108
  %v1448 = vsel %vm645, %v1440, %v1110
  %v1449 = vsel %vm645, %v1441, %v1112
  %v1450 = vsel %vm654, %v1442, %v1139
  %v1451 = vsel %vm654, %v1443, %v1141
  %v1452 = vsel %vm654, %v1444, %v1143
  %v1453 = vsel %vm654, %v1445, %v1145
  %v1454 = vsel %vm654, %v1446, %v1147
  %v1455 = vsel %vm654, %v1447, %v1149
  %v1456 = vsel %vm654, %v1448, %v1151
  %v1457 = vsel %vm654, %v1449, %v1153
  %v1458 = vsel %vm663, %v1450, %v1180
  %v1459 = vsel %vm663, %v1451, %v1182
  %v1460 = vsel %vm663, %v1452, %v1184
  %v1461 = vsel %vm663, %v1453, %v1186
  %v1462 = vsel %vm663, %v1454, %v1188
  %v1463 = vsel %vm663, %v1455, %v1190
  %v1464 = vsel %vm663, %v1456, %v1192
  %v1465 = vsel %vm663, %v1457, %v1194
  %v1466 = vsel %vm672, %v1458, %v1204
  %v1467 = vsel %vm672, %v1459, %v1206
  %v1468 = vsel %vm672, %v1460, %v1208
  %v1469 = vsel %vm672, %v1461, %v1210
  %v1470 = vsel %vm672, %v1462, %v1212
  %v1471 = vsel %vm672, %v1463, %v1214
  %v1472 = vsel %vm672, %v1464, %v1216
  %v1473 = vsel %vm672, %v1465, %v1218
  %v1474 = vsel %vm681, %v1466, %v1231
  %v1475 = vsel %vm681, %v1467, %v1233
  %v1476 = vsel %vm681, %v1468, %v1235
  %v1477 = vsel %vm681, %v1469, %v1237
  %v1478 = vsel %vm681, %v1470, %v1239
  %v1479 = vsel %vm681, %v1471, %v1241
  %v1480 = vsel %vm681, %v1472, %v1243
  %v1481 = vsel %vm681, %v1473, %v1245
  %v1482 = vsel %vm690, %v1474, %v1257
  %v1483 = vsel %vm690, %v1475, %v1259
  %v1484 = vsel %vm690, %v1476, %v1261
  %v1485 = vsel %vm690, %v1477, %v1263
  %v1486 = vsel %vm690, %v1478, %v1265
  %v1487 = vsel %vm690, %v1479, %v1267
  %v1488 = vsel %vm690, %v1480, %v1269
  %v1489 = vsel %vm690, %v1481, %v1271
  %v1490 = vsel %vm699, %v1482, %v1283
  %v1491 = vsel %vm699, %v1483, %v1285
  %v1492 = vsel %vm699, %v1484, %v1287
  %v1493 = vsel %vm699, %v1485, %v1289
  %v1494 = vsel %vm699, %v1486, %v1291
  %v1495 = vsel %vm699, %v1487, %v1293
  %v1496 = vsel %vm699, %v1488, %v1295
  %v1497 = vsel %vm699, %v1489, %v1297
  %v1498 = vsel %vm708, %v1490, %v1309
  %v1499 = vsel %vm708, %v1491, %v1311
  %v1500 = vsel %vm708, %v1492, %v1313
  %v1501 = vsel %vm708, %v1493, %v1315
  %v1502 = vsel %vm708, %v1494, %v1317
  %v1503 = vsel %vm708, %v1495, %v1319
  %v1504 = vsel %vm708, %v1496, %v1321
  %v1505 = vsel %vm708, %v1497, %v1323
  %v1506 = vsel %vm717, %v1498, %v1335
  %v1507 = vsel %vm717, %v1499, %v1337
  %v1508 = vsel %vm717, %v1500, %v1339
  %v1509 = vsel %vm717, %v1501, %v1341
  %v1510 = vsel %vm717, %v1502, %v1343
  %v1511 = vsel %vm717, %v1503, %v1345
  %v1512 = vsel %vm717, %v1504, %v1347
  %v1513 = vsel %vm717, %v1505, %v1349
  %v1514 = vsel %vm726, %v1506, %v1361
  %v1515 = vsel %vm726, %v1507, %v1363
  %v1516 = vsel %vm726, %v1508, %v1365
  %v1517 = vsel %vm726, %v1509, %v1367
  %v1518 = vsel %vm726, %v1510, %v1369
  %v1519 = vsel %vm726, %v1511, %v1371
  %v1520 = vsel %vm726, %v1512, %v1373
  %v1521 = vsel %vm726, %v1513, %v1375
  %v1522 = vsel %vm735, %v1514, %v1387
  %v1523 = vsel %vm735, %v1515, %v1389
  %v1524 = vsel %vm735, %v1516, %v1391
  %v1525 = vsel %vm735, %v1517, %v1393
  %v1526 = vsel %vm735, %v1518, %v1395
  %v1527 = vsel %vm735, %v1519, %v1397
  %v1528 = vsel %vm735, %v1520, %v1399
  %v1529 = vsel %vm735, %v1521, %v1401
  %v1531 = vsel %vm747, %v1522, 0
  %v1534 = vsel %vm747, %v1523, 0
  %v1537 = vsel %vm747, %v1524, 0
  %v1540 = vsel %vm747, %v1525, 0
  %v1543 = vsel %vm747, %v1526, 0
  %v1546 = vsel %vm747, %v1527, 0
  %v1549 = vsel %vm747, %v1528, 0
  %v1552 = vsel %vm747, %v1529, 0
  %1554 = vmatpush.msra.mxu0 0.0
  %1555 = vmatpush.msra.mxu0 0.0
  %1556 = vmatpush.msra.mxu0 0.0
  %1557 = vmatpush.msra.mxu0 0.0
  %1558 = vmatpush.msra.mxu0 0.0
  %1559 = vmatpush.msra.mxu0 0.0
  %1560 = vmatpush.msra.mxu0 0.0
  %1561 = vmatpush.msra.mxu0 0.0
  %1562 = vmatpush.msra.mxu0 %v89
  %1563 = vmatpush.msra.mxu0 %v88
  %1564 = vmatpush.msra.mxu0 %v87
  %1565 = vmatpush.msra.mxu0 %v86
  %1566 = vmatpush.msra.mxu0 %v85
  %1567 = vmatpush.msra.mxu0 %v84
  %1568 = vmatpush.msra.mxu0 %v83
  %1569 = vmatpush.msra.mxu0 %v82
  %1570 = vmatmul.f32.gmra.mxu0 %v1531
  %v1571 = vpop.f32.mrf.mxu0
  %v1572 = vadd.f32 %v745, %v1571
  %1573 = vmatmul.f32.gmra.mxu0 %v1534
  %v1574 = vpop.f32.mrf.mxu0
  %v1575 = vadd.f32 %v745, %v1574
  %1576 = vmatmul.f32.gmra.mxu0 %v1537
  %v1577 = vpop.f32.mrf.mxu0
  %v1578 = vadd.f32 %v745, %v1577
  %1579 = vmatmul.f32.gmra.mxu0 %v1540
  %v1580 = vpop.f32.mrf.mxu0
  %v1581 = vadd.f32 %v745, %v1580
  %1582 = vmatmul.f32.gmra.mxu0 %v1543
  %v1583 = vpop.f32.mrf.mxu0
  %v1584 = vadd.f32 %v745, %v1583
  %1585 = vmatmul.f32.gmra.mxu0 %v1546
  %v1586 = vpop.f32.mrf.mxu0
  %v1587 = vadd.f32 %v745, %v1586
  %1588 = vmatmul.f32.gmra.mxu0 %v1549
  %v1589 = vpop.f32.mrf.mxu0
  %v1590 = vadd.f32 %v745, %v1589
  %1591 = vmatmul.f32.gmra.mxu0 %v1552
  %v1592 = vpop.f32.mrf.mxu0
  %v1593 = vadd.f32 %v745, %v1592
  %1594 = vdwg.mxu0
  %v1595 = vmax.f32 %v1572, 0.0
  %v1596 = vmax.f32 %v1575, 0.0
  %v1597 = vmax.f32 %v1578, 0.0
  %v1598 = vmax.f32 %v1581, 0.0
  %v1599 = vmax.f32 %v1584, 0.0
  %v1600 = vmax.f32 %v1587, 0.0
  %v1601 = vmax.f32 %v1590, 0.0
  %v1602 = vmax.f32 %v1593, 0.0
  %1603 = vmatpush.msra.mxu0 0.0
  %1604 = vmatpush.msra.mxu0 0.0
  %1605 = vmatpush.msra.mxu0 0.0
  %1606 = vmatpush.msra.mxu0 0.0
  %1607 = vmatpush.msra.mxu0 0.0
  %1608 = vmatpush.msra.mxu0 0.0
  %1609 = vmatpush.msra.mxu0 0.0
  %1610 = vmatpush.msra.mxu0 0.0
  %1611 = vmatpush.msra.mxu0 %v1602
  %1612 = vmatpush.msra.mxu0 %v1601
  %1613 = vmatpush.msra.mxu0 %v1600
  %1614 = vmatpush.msra.mxu0 %v1599
  %1615 = vmatpush.msra.mxu0 %v1598
  %1616 = vmatpush.msra.mxu0 %v1597
  %1617 = vmatpush.msra.mxu0 %v1596
  %1618 = vmatpush.msra.mxu0 %v1595
  %1619 = vmatmul.f32.gmra.mxu0 %v822
  %v1620 = vpop.f32.mrf.mxu0
  %v1621 = vadd.f32 0.0, %v1620
  %1622 = vmatmul.f32.gmra.mxu0 %v825
  %v1623 = vpop.f32.mrf.mxu0
  %v1624 = vadd.f32 0.0, %v1623
  %1625 = vmatmul.f32.gmra.mxu0 %v828
  %v1626 = vpop.f32.mrf.mxu0
  %v1627 = vadd.f32 0.0, %v1626
  %1628 = vmatmul.f32.gmra.mxu0 %v831
  %v1629 = vpop.f32.mrf.mxu0
  %v1630 = vadd.f32 0.0, %v1629
  %1631 = vdwg.mxu0
  %1632 = vmatpush.msra.mxu0 0.0
  %1633 = vmatpush.msra.mxu0 0.0
  %1634 = vmatpush.msra.mxu0 0.0
  %1635 = vmatpush.msra.mxu0 0.0
  %1636 = vmatpush.msra.mxu0 0.0
  %1637 = vmatpush.msra.mxu0 0.0
  %1638 = vmatpush.msra.mxu0 0.0
  %1639 = vmatpush.msra.mxu0 0.0
  %1640 = vmatpush.msra.mxu0 %v1602
  %1641 = vmatpush.msra.mxu0 %v1601
  %1642 = vmatpush.msra.mxu0 %v1600
  %1643 = vmatpush.msra.mxu0 %v1599
  %1644 = vmatpush.msra.mxu0 %v1598
  %1645 = vmatpush.msra.mxu0 %v1597
  %1646 = vmatpush.msra.mxu0 %v1596
  %1647 = vmatpush.msra.mxu0 %v1595
  %1648 = vmatmul.f32.gmra.mxu0 %v863
  %v1649 = vpop.f32.mrf.mxu0
  %v1650 = vadd.f32 0.0, %v1649
  %1651 = vmatmul.f32.gmra.mxu0 %v866
  %v1652 = vpop.f32.mrf.mxu0
  %v1653 = vadd.f32 0.0, %v1652
  %1654 = vmatmul.f32.gmra.mxu0 %v869
  %v1655 = vpop.f32.mrf.mxu0
  %v1656 = vadd.f32 0.0, %v1655
  %1657 = vmatmul.f32.gmra.mxu0 %v872
  %v1658 = vpop.f32.mrf.mxu0
  %v1659 = vadd.f32 0.0, %v1658
  %1660 = vdwg.mxu0
  %v1661 = vmax.f32 %v1621, %v1650
  %v1662 = vmax.f32 %v1624, %v1653
  %v1663 = vmax.f32 %v1627, %v1656
  %v1664 = vmax.f32 %v1630, %v1659
  %v1665 = vld [vmem:[%s3] sm:$0xff]
  %v1666 = vld [vmem:[%s3 + $0x8] sm:$0xff]
  %v1667 = vld [vmem:[%s3 + $0x10] sm:$0xff]
  %v1668 = vld [vmem:[%s3 + $0x18] sm:$0xff]
  %v1669 = vld [vmem:[%s3 + $0x20] sm:$0xff]
  %v1670 = vld [vmem:[%s3 + $0x28] sm:$0xff]
  %v1671 = vld [vmem:[%s3 + $0x30] sm:$0xff]
  %v1672 = vld [vmem:[%s3 + $0x38] sm:$0xff]
  %v1673 = vld [vmem:[%s4] sm:$0x1]
  %v1674 = vld [vmem:[%s9] sm:$0xff]
  %v1675 = vld [vmem:[%s9 + $0x8] sm:$0xf]
  %v1676 = vld [vmem:[%s10] sm:$0xff]
  %v1677 = vld [vmem:[%s10 + $0x8] sm:$0xf]
  %v1682 = vrot.slane %v903, 1
  %v1683 = vrot.slane %v904, 1
  %v1684 = vsel %vm108, %v1682, %v1683
  %v1685 = vrot.slane %v905, 1
  %v1686 = vsel %vm108, %v1683, %v1685
  %v1687 = vrot.slane %v906, 1
  %v1688 = vsel %vm108, %v1685, %v1687
  %1689 = vrot.lane.b32.xlu0 %v1684, 8
  %v1690 = vpop.permute.xlu0 %1689
  %1691 = vrot.lane.b32.xlu0 %v1686, 8
  %v1692 = vpop.permute.xlu0 %1691
  %1693 = vrot.lane.b32.xlu0 %v1688, 8
  %v1694 = vpop.permute.xlu0 %1693
  %1695 = vrot.lane.b32.xlu0 %v1687, 8
  %v1696 = vpop.permute.xlu0 %1695
  %v1701 = vrot.slane %v903, 2
  %v1702 = vrot.slane %v904, 2
  %v1703 = vsel %vm150, %v1701, %v1702
  %v1704 = vrot.slane %v905, 2
  %v1705 = vsel %vm150, %v1702, %v1704
  %v1706 = vrot.slane %v906, 2
  %v1707 = vsel %vm150, %v1704, %v1706
  %1708 = vrot.lane.b32.xlu0 %v1703, 16
  %v1709 = vpop.permute.xlu0 %1708
  %1710 = vrot.lane.b32.xlu0 %v1705, 16
  %v1711 = vpop.permute.xlu0 %1710
  %1712 = vrot.lane.b32.xlu0 %v1707, 16
  %v1713 = vpop.permute.xlu0 %1712
  %1714 = vrot.lane.b32.xlu0 %v1706, 16
  %v1715 = vpop.permute.xlu0 %1714
  %v1720 = vrot.slane %v903, 3
  %v1721 = vrot.slane %v904, 3
  %v1722 = vsel %vm192, %v1720, %v1721
  %v1723 = vrot.slane %v905, 3
  %v1724 = vsel %vm192, %v1721, %v1723
  %v1725 = vrot.slane %v906, 3
  %v1726 = vsel %vm192, %v1723, %v1725
  %1727 = vrot.lane.b32.xlu0 %v1722, 24
  %v1728 = vpop.permute.xlu0 %1727
  %1729 = vrot.lane.b32.xlu0 %v1724, 24
  %v1730 = vpop.permute.xlu0 %1729
  %1731 = vrot.lane.b32.xlu0 %v1726, 24
  %v1732 = vpop.permute.xlu0 %1731
  %1733 = vrot.lane.b32.xlu0 %v1725, 24
  %v1734 = vpop.permute.xlu0 %1733
  %v1739 = vrot.slane %v903, 4
  %v1740 = vrot.slane %v904, 4
  %v1741 = vsel %vm234, %v1739, %v1740
  %v1742 = vrot.slane %v905, 4
  %v1743 = vsel %vm234, %v1740, %v1742
  %v1744 = vrot.slane %v906, 4
  %v1745 = vsel %vm234, %v1742, %v1744
  %1746 = vrot.lane.b32.xlu0 %v1741, 32
  %v1747 = vpop.permute.xlu0 %1746
  %1748 = vrot.lane.b32.xlu0 %v1743, 32
  %v1749 = vpop.permute.xlu0 %1748
  %1750 = vrot.lane.b32.xlu0 %v1745, 32
  %v1751 = vpop.permute.xlu0 %1750
  %1752 = vrot.lane.b32.xlu0 %v1744, 32
  %v1753 = vpop.permute.xlu0 %1752
  %v1758 = vrot.slane %v903, 5
  %v1759 = vrot.slane %v904, 5
  %v1760 = vsel %vm276, %v1758, %v1759
  %v1761 = vrot.slane %v905, 5
  %v1762 = vsel %vm276, %v1759, %v1761
  %v1763 = vrot.slane %v906, 5
  %v1764 = vsel %vm276, %v1761, %v1763
  %1765 = vrot.lane.b32.xlu0 %v1760, 40
  %v1766 = vpop.permute.xlu0 %1765
  %1767 = vrot.lane.b32.xlu0 %v1762, 40
  %v1768 = vpop.permute.xlu0 %1767
  %1769 = vrot.lane.b32.xlu0 %v1764, 40
  %v1770 = vpop.permute.xlu0 %1769
  %1771 = vrot.lane.b32.xlu0 %v1763, 40
  %v1772 = vpop.permute.xlu0 %1771
  %v1777 = vrot.slane %v903, 6
  %v1778 = vrot.slane %v904, 6
  %v1779 = vsel %vm318, %v1777, %v1778
  %v1780 = vrot.slane %v905, 6
  %v1781 = vsel %vm318, %v1778, %v1780
  %v1782 = vrot.slane %v906, 6
  %v1783 = vsel %vm318, %v1780, %v1782
  %1784 = vrot.lane.b32.xlu0 %v1779, 48
  %v1785 = vpop.permute.xlu0 %1784
  %1786 = vrot.lane.b32.xlu0 %v1781, 48
  %v1787 = vpop.permute.xlu0 %1786
  %1788 = vrot.lane.b32.xlu0 %v1783, 48
  %v1789 = vpop.permute.xlu0 %1788
  %1790 = vrot.lane.b32.xlu0 %v1782, 48
  %v1791 = vpop.permute.xlu0 %1790
  %v1796 = vrot.slane %v903, 7
  %v1797 = vrot.slane %v904, 7
  %v1798 = vsel %vm360, %v1796, %v1797
  %v1799 = vrot.slane %v905, 7
  %v1800 = vsel %vm360, %v1797, %v1799
  %v1801 = vrot.slane %v906, 7
  %v1802 = vsel %vm360, %v1799, %v1801
  %1803 = vrot.lane.b32.xlu0 %v1798, 56
  %v1804 = vpop.permute.xlu0 %1803
  %1805 = vrot.lane.b32.xlu0 %v1800, 56
  %v1806 = vpop.permute.xlu0 %1805
  %1807 = vrot.lane.b32.xlu0 %v1802, 56
  %v1808 = vpop.permute.xlu0 %1807
  %1809 = vrot.lane.b32.xlu0 %v1801, 56
  %v1810 = vpop.permute.xlu0 %1809
  %v1815 = vsel %vm618, %v903, %v1690
  %v1816 = vsel %vm618, %v904, %v1692
  %v1817 = vsel %vm618, %v905, %v1694
  %v1818 = vsel %vm618, %v906, %v1696
  %v1819 = vsel %vm636, %v1815, %v1709
  %v1820 = vsel %vm636, %v1816, %v1711
  %v1821 = vsel %vm636, %v1817, %v1713
  %v1822 = vsel %vm636, %v1818, %v1715
  %v1823 = vsel %vm654, %v1819, %v1728
  %v1824 = vsel %vm654, %v1820, %v1730
  %v1825 = vsel %vm654, %v1821, %v1732
  %v1826 = vsel %vm654, %v1822, %v1734
  %v1827 = vsel %vm672, %v1823, %v1747
  %v1828 = vsel %vm672, %v1824, %v1749
  %v1829 = vsel %vm672, %v1825, %v1751
  %v1830 = vsel %vm672, %v1826, %v1753
  %v1831 = vsel %vm690, %v1827, %v1766
  %v1832 = vsel %vm690, %v1828, %v1768
  %v1833 = vsel %vm690, %v1829, %v1770
  %v1834 = vsel %vm690, %v1830, %v1772
  %v1835 = vsel %vm708, %v1831, %v1785
  %v1836 = vsel %vm708, %v1832, %v1787
  %v1837 = vsel %vm708, %v1833, %v1789
  %v1838 = vsel %vm708, %v1834, %v1791
  %v1839 = vsel %vm726, %v1835, %v1804
  %v1840 = vsel %vm726, %v1836, %v1806
  %v1841 = vsel %vm726, %v1837, %v1808
  %v1842 = vsel %vm726, %v1838, %v1810
  %v1844 = vperm.slane %v1673, 0
  %v1847 = vsel %vm747, %v1839, 0
  %v1850 = vsel %vm747, %v1840, 0
  %v1853 = vsel %vm747, %v1841, 0
  %v1856 = vsel %vm747, %v1842, 0
  %1858 = vmatpush.msra.mxu0 0.0
  %1859 = vmatpush.msra.mxu0 0.0
  %1860 = vmatpush.msra.mxu0 0.0
  %1861 = vmatpush.msra.mxu0 0.0
  %1862 = vmatpush.msra.mxu0 0.0
  %1863 = vmatpush.msra.mxu0 0.0
  %1864 = vmatpush.msra.mxu0 0.0
  %1865 = vmatpush.msra.mxu0 0.0
  %1866 = vmatpush.msra.mxu0 %v1672
  %1867 = vmatpush.msra.mxu0 %v1671
  %1868 = vmatpush.msra.mxu0 %v1670
  %1869 = vmatpush.msra.mxu0 %v1669
  %1870 = vmatpush.msra.mxu0 %v1668
  %1871 = vmatpush.msra.mxu0 %v1667
  %1872 = vmatpush.msra.mxu0 %v1666
  %1873 = vmatpush.msra.mxu0 %v1665
  %1874 = vmatmul.f32.gmra.mxu0 %v1847
  %v1875 = vpop.f32.mrf.mxu0
  %v1876 = vadd.f32 %v1844, %v1875
  %1877 = vmatmul.f32.gmra.mxu0 %v1850
  %v1878 = vpop.f32.mrf.mxu0
  %v1879 = vadd.f32 %v1844, %v1878
  %1880 = vmatmul.f32.gmra.mxu0 %v1853
  %v1881 = vpop.f32.mrf.mxu0
  %v1882 = vadd.f32 %v1844, %v1881
  %1883 = vmatmul.f32.gmra.mxu0 %v1856
  %v1884 = vpop.f32.mrf.mxu0
  %v1885 = vadd.f32 %v1844, %v1884
  %1886 = vdwg.mxu0
  %v1887 = vmax.f32 %v1876, 0.0
  %v1888 = vmax.f32 %v1879, 0.0
  %v1889 = vmax.f32 %v1882, 0.0
  %v1890 = vmax.f32 %v1885, 0.0
  %vm1891 = vcmask 203776
  %v1893 = vsel %vm1891, %v1674, 0
  %v1896 = vsel %vm1891, %v1675, 0
  %v1899 = vsel %vm360, %v1890, 0
  %1901 = vmatpush.msra.mxu0 0.0
  %1902 = vmatpush.msra.mxu0 0.0
  %1903 = vmatpush.msra.mxu0 0.0
  %1904 = vmatpush.msra.mxu0 0.0
  %1905 = vmatpush.msra.mxu0 0.0
  %1906 = vmatpush.msra.mxu0 0.0
  %1907 = vmatpush.msra.mxu0 0.0
  %1908 = vmatpush.msra.mxu0 0.0
  %1909 = vmatpush.msra.mxu0 0.0
  %1910 = vmatpush.msra.mxu0 0.0
  %1911 = vmatpush.msra.mxu0 0.0
  %1912 = vmatpush.msra.mxu0 0.0
  %1913 = vmatpush.msra.mxu0 %v1899
  %1914 = vmatpush.msra.mxu0 %v1889
  %1915 = vmatpush.msra.mxu0 %v1888
  %1916 = vmatpush.msra.mxu0 %v1887
  %1917 = vmatmul.f32.gmra.mxu0 %v1893
  %v1918 = vpop.f32.mrf.mxu0
  %v1919 = vadd.f32 0.0, %v1918
  %1920 = vmatmul.f32.gmra.mxu0 %v1896
  %v1921 = vpop.f32.mrf.mxu0
  %v1922 = vadd.f32 0.0, %v1921
  %1923 = vdwg.mxu0
  %v1925 = vsel %vm1891, %v1676, 0
  %v1928 = vsel %vm1891, %v1677, 0
  %1930 = vmatpush.msra.mxu0 0.0
  %1931 = vmatpush.msra.mxu0 0.0
  %1932 = vmatpush.msra.mxu0 0.0
  %1933 = vmatpush.msra.mxu0 0.0
  %1934 = vmatpush.msra.mxu0 0.0
  %1935 = vmatpush.msra.mxu0 0.0
  %1936 = vmatpush.msra.mxu0 0.0
  %1937 = vmatpush.msra.mxu0 0.0
  %1938 = vmatpush.msra.mxu0 0.0
  %1939 = vmatpush.msra.mxu0 0.0
  %1940 = vmatpush.msra.mxu0 0.0
  %1941 = vmatpush.msra.mxu0 0.0
  %1942 = vmatpush.msra.mxu0 %v1899
  %1943 = vmatpush.msra.mxu0 %v1889
  %1944 = vmatpush.msra.mxu0 %v1888
  %1945 = vmatpush.msra.mxu0 %v1887
  %1946 = vmatmul.f32.gmra.mxu0 %v1925
  %v1947 = vpop.f32.mrf.mxu0
  %v1948 = vadd.f32 0.0, %v1947
  %1949 = vmatmul.f32.gmra.mxu0 %v1928
  %v1950 = vpop.f32.mrf.mxu0
  %v1951 = vadd.f32 0.0, %v1950
  %1952 = vdwg.mxu0
  %v1953 = vmax.f32 %v1919, %v1948
  %v1954 = vmax.f32 %v1922, %v1951
  %v1959 = vrot.slane %v1661, 1
  %v1960 = vrot.slane %v1662, 1
  %v1961 = vsel %vm108, %v1959, %v1960
  %v1962 = vrot.slane %v1663, 1
  %v1963 = vsel %vm108, %v1960, %v1962
  %v1964 = vrot.slane %v1664, 1
  %v1965 = vsel %vm108, %v1962, %v1964
  %1966 = vrot.lane.b32.xlu0 %v1961, 8
  %v1967 = vpop.permute.xlu0 %1966
  %1968 = vrot.lane.b32.xlu0 %v1963, 8
  %v1969 = vpop.permute.xlu0 %1968
  %1970 = vrot.lane.b32.xlu0 %v1965, 8
  %v1971 = vpop.permute.xlu0 %1970
  %1972 = vrot.lane.b32.xlu0 %v1964, 8
  %v1973 = vpop.permute.xlu0 %1972
  %v1978 = vrot.slane %v1661, 2
  %v1979 = vrot.slane %v1662, 2
  %v1980 = vsel %vm150, %v1978, %v1979
  %v1981 = vrot.slane %v1663, 2
  %v1982 = vsel %vm150, %v1979, %v1981
  %v1983 = vrot.slane %v1664, 2
  %v1984 = vsel %vm150, %v1981, %v1983
  %1985 = vrot.lane.b32.xlu0 %v1980, 16
  %v1986 = vpop.permute.xlu0 %1985
  %1987 = vrot.lane.b32.xlu0 %v1982, 16
  %v1988 = vpop.permute.xlu0 %1987
  %1989 = vrot.lane.b32.xlu0 %v1984, 16
  %v1990 = vpop.permute.xlu0 %1989
  %1991 = vrot.lane.b32.xlu0 %v1983, 16
  %v1992 = vpop.permute.xlu0 %1991
  %v1997 = vrot.slane %v1661, 3
  %v1998 = vrot.slane %v1662, 3
  %v1999 = vsel %vm192, %v1997, %v1998
  %v2000 = vrot.slane %v1663, 3
  %v2001 = vsel %vm192, %v1998, %v2000
  %v2002 = vrot.slane %v1664, 3
  %v2003 = vsel %vm192, %v2000, %v2002
  %2004 = vrot.lane.b32.xlu0 %v1999, 24
  %v2005 = vpop.permute.xlu0 %2004
  %2006 = vrot.lane.b32.xlu0 %v2001, 24
  %v2007 = vpop.permute.xlu0 %2006
  %2008 = vrot.lane.b32.xlu0 %v2003, 24
  %v2009 = vpop.permute.xlu0 %2008
  %2010 = vrot.lane.b32.xlu0 %v2002, 24
  %v2011 = vpop.permute.xlu0 %2010
  %v2016 = vrot.slane %v1661, 4
  %v2017 = vrot.slane %v1662, 4
  %v2018 = vsel %vm234, %v2016, %v2017
  %v2019 = vrot.slane %v1663, 4
  %v2020 = vsel %vm234, %v2017, %v2019
  %v2021 = vrot.slane %v1664, 4
  %v2022 = vsel %vm234, %v2019, %v2021
  %2023 = vrot.lane.b32.xlu0 %v2018, 32
  %v2024 = vpop.permute.xlu0 %2023
  %2025 = vrot.lane.b32.xlu0 %v2020, 32
  %v2026 = vpop.permute.xlu0 %2025
  %2027 = vrot.lane.b32.xlu0 %v2022, 32
  %v2028 = vpop.permute.xlu0 %2027
  %2029 = vrot.lane.b32.xlu0 %v2021, 32
  %v2030 = vpop.permute.xlu0 %2029
  %v2035 = vrot.slane %v1661, 5
  %v2036 = vrot.slane %v1662, 5
  %v2037 = vsel %vm276, %v2035, %v2036
  %v2038 = vrot.slane %v1663, 5
  %v2039 = vsel %vm276, %v2036, %v2038
  %v2040 = vrot.slane %v1664, 5
  %v2041 = vsel %vm276, %v2038, %v2040
  %2042 = vrot.lane.b32.xlu0 %v2037, 40
  %v2043 = vpop.permute.xlu0 %2042
  %2044 = vrot.lane.b32.xlu0 %v2039, 40
  %v2045 = vpop.permute.xlu0 %2044
  %2046 = vrot.lane.b32.xlu0 %v2041, 40
  %v2047 = vpop.permute.xlu0 %2046
  %2048 = vrot.lane.b32.xlu0 %v2040, 40
  %v2049 = vpop.permute.xlu0 %2048
  %v2054 = vrot.slane %v1661, 6
  %v2055 = vrot.slane %v1662, 6
  %v2056 = vsel %vm318, %v2054, %v2055
  %v2057 = vrot.slane %v1663, 6
  %v2058 = vsel %vm318, %v2055, %v2057
  %v2059 = vrot.slane %v1664, 6
  %v2060 = vsel %vm318, %v2057, %v2059
  %2061 = vrot.lane.b32.xlu0 %v2056, 48
  %v2062 = vpop.permute.xlu0 %2061
  %2063 = vrot.lane.b32.xlu0 %v2058, 48
  %v2064 = vpop.permute.xlu0 %2063
  %2065 = vrot.lane.b32.xlu0 %v2060, 48
  %v2066 = vpop.permute.xlu0 %2065
  %2067 = vrot.lane.b32.xlu0 %v2059, 48
  %v2068 = vpop.permute.xlu0 %2067
  %v2073 = vrot.slane %v1661, 7
  %v2074 = vrot.slane %v1662, 7
  %v2075 = vsel %vm360, %v2073, %v2074
  %v2076 = vrot.slane %v1663, 7
  %v2077 = vsel %vm360, %v2074, %v2076
  %v2078 = vrot.slane %v1664, 7
  %v2079 = vsel %vm360, %v2076, %v2078
  %2080 = vrot.lane.b32.xlu0 %v2075, 56
  %v2081 = vpop.permute.xlu0 %2080
  %2082 = vrot.lane.b32.xlu0 %v2077, 56
  %v2083 = vpop.permute.xlu0 %2082
  %2084 = vrot.lane.b32.xlu0 %v2079, 56
  %v2085 = vpop.permute.xlu0 %2084
  %2086 = vrot.lane.b32.xlu0 %v2078, 56
  %v2087 = vpop.permute.xlu0 %2086
  %v2092 = vsel %vm618, %v1661, %v1967
  %v2093 = vsel %vm618, %v1662, %v1969
  %v2094 = vsel %vm618, %v1663, %v1971
  %v2095 = vsel %vm618, %v1664, %v1973
  %v2096 = vsel %vm636, %v2092, %v1986
  %v2097 = vsel %vm636, %v2093, %v1988
  %v2098 = vsel %vm636, %v2094, %v1990
  %v2099 = vsel %vm636, %v2095, %v1992
  %v2100 = vsel %vm654, %v2096, %v2005
  %v2101 = vsel %vm654, %v2097, %v2007
  %v2102 = vsel %vm654, %v2098, %v2009
  %v2103 = vsel %vm654, %v2099, %v2011
  %v2104 = vsel %vm672, %v2100, %v2024
  %v2105 = vsel %vm672, %v2101, %v2026
  %v2106 = vsel %vm672, %v2102, %v2028
  %v2107 = vsel %vm672, %v2103, %v2030
  %v2108 = vsel %vm690, %v2104, %v2043
  %v2109 = vsel %vm690, %v2105, %v2045
  %v2110 = vsel %vm690, %v2106, %v2047
  %v2111 = vsel %vm690, %v2107, %v2049
  %v2112 = vsel %vm708, %v2108, %v2062
  %v2113 = vsel %vm708, %v2109, %v2064
  %v2114 = vsel %vm708, %v2110, %v2066
  %v2115 = vsel %vm708, %v2111, %v2068
  %v2116 = vsel %vm726, %v2112, %v2081
  %v2117 = vsel %vm726, %v2113, %v2083
  %v2118 = vsel %vm726, %v2114, %v2085
  %v2119 = vsel %vm726, %v2115, %v2087
  %v2121 = vsel %vm747, %v2116, 0
  %v2124 = vsel %vm747, %v2117, 0
  %v2127 = vsel %vm747, %v2118, 0
  %v2130 = vsel %vm747, %v2119, 0
  %2132 = vmatpush.msra.mxu0 0.0
  %2133 = vmatpush.msra.mxu0 0.0
  %2134 = vmatpush.msra.mxu0 0.0
  %2135 = vmatpush.msra.mxu0 0.0
  %2136 = vmatpush.msra.mxu0 0.0
  %2137 = vmatpush.msra.mxu0 0.0
  %2138 = vmatpush.msra.mxu0 0.0
  %2139 = vmatpush.msra.mxu0 0.0
  %2140 = vmatpush.msra.mxu0 %v1672
  %2141 = vmatpush.msra.mxu0 %v1671
  %2142 = vmatpush.msra.mxu0 %v1670
  %2143 = vmatpush.msra.mxu0 %v1669
  %2144 = vmatpush.msra.mxu0 %v1668
  %2145 = vmatpush.msra.mxu0 %v1667
  %2146 = vmatpush.msra.mxu0 %v1666
  %2147 = vmatpush.msra.mxu0 %v1665
  %2148 = vmatmul.f32.gmra.mxu0 %v2121
  %v2149 = vpop.f32.mrf.mxu0
  %v2150 = vadd.f32 %v1844, %v2149
  %2151 = vmatmul.f32.gmra.mxu0 %v2124
  %v2152 = vpop.f32.mrf.mxu0
  %v2153 = vadd.f32 %v1844, %v2152
  %2154 = vmatmul.f32.gmra.mxu0 %v2127
  %v2155 = vpop.f32.mrf.mxu0
  %v2156 = vadd.f32 %v1844, %v2155
  %2157 = vmatmul.f32.gmra.mxu0 %v2130
  %v2158 = vpop.f32.mrf.mxu0
  %v2159 = vadd.f32 %v1844, %v2158
  %2160 = vdwg.mxu0
  %v2161 = vmax.f32 %v2150, 0.0
  %v2162 = vmax.f32 %v2153, 0.0
  %v2163 = vmax.f32 %v2156, 0.0
  %v2164 = vmax.f32 %v2159, 0.0
  %v2166 = vsel %vm360, %v2164, 0
  %2168 = vmatpush.msra.mxu0 0.0
  %2169 = vmatpush.msra.mxu0 0.0
  %2170 = vmatpush.msra.mxu0 0.0
  %2171 = vmatpush.msra.mxu0 0.0
  %2172 = vmatpush.msra.mxu0 0.0
  %2173 = vmatpush.msra.mxu0 0.0
  %2174 = vmatpush.msra.mxu0 0.0
  %2175 = vmatpush.msra.mxu0 0.0
  %2176 = vmatpush.msra.mxu0 0.0
  %2177 = vmatpush.msra.mxu0 0.0
  %2178 = vmatpush.msra.mxu0 0.0
  %2179 = vmatpush.msra.mxu0 0.0
  %2180 = vmatpush.msra.mxu0 %v2166
  %2181 = vmatpush.msra.mxu0 %v2163
  %2182 = vmatpush.msra.mxu0 %v2162
  %2183 = vmatpush.msra.mxu0 %v2161
  %2184 = vmatmul.f32.gmra.mxu0 %v1893
  %v2185 = vpop.f32.mrf.mxu0
  %v2186 = vadd.f32 0.0, %v2185
  %2187 = vmatmul.f32.gmra.mxu0 %v1896
  %v2188 = vpop.f32.mrf.mxu0
  %v2189 = vadd.f32 0.0, %v2188
  %2190 = vdwg.mxu0
  %2191 = vmatpush.msra.mxu0 0.0
  %2192 = vmatpush.msra.mxu0 0.0
  %2193 = vmatpush.msra.mxu0 0.0
  %2194 = vmatpush.msra.mxu0 0.0
  %2195 = vmatpush.msra.mxu0 0.0
  %2196 = vmatpush.msra.mxu0 0.0
  %2197 = vmatpush.msra.mxu0 0.0
  %2198 = vmatpush.msra.mxu0 0.0
  %2199 = vmatpush.msra.mxu0 0.0
  %2200 = vmatpush.msra.mxu0 0.0
  %2201 = vmatpush.msra.mxu0 0.0
  %2202 = vmatpush.msra.mxu0 0.0
  %2203 = vmatpush.msra.mxu0 %v2166
  %2204 = vmatpush.msra.mxu0 %v2163
  %2205 = vmatpush.msra.mxu0 %v2162
  %2206 = vmatpush.msra.mxu0 %v2161
  %2207 = vmatmul.f32.gmra.mxu0 %v1925
  %v2208 = vpop.f32.mrf.mxu0
  %v2209 = vadd.f32 0.0, %v2208
  %2210 = vmatmul.f32.gmra.mxu0 %v1928
  %v2211 = vpop.f32.mrf.mxu0
  %v2212 = vadd.f32 0.0, %v2211
  %2213 = vdwg.mxu0
  %v2214 = vmax.f32 %v2186, %v2209
  %v2215 = vmax.f32 %v2189, %v2212
  %v2216 = vld [vmem:[%s5] sm:$0xff]
  %v2217 = vld [vmem:[%s5 + $0x8] sm:$0xff]
  %v2218 = vld [vmem:[%s5 + $0x10] sm:$0xff]
  %v2219 = vld [vmem:[%s5 + $0x18] sm:$0xff]
  %v2220 = vld [vmem:[%s5 + $0x20] sm:$0xff]
  %v2221 = vld [vmem:[%s5 + $0x28] sm:$0xff]
  %v2222 = vld [vmem:[%s5 + $0x30] sm:$0xff]
  %v2223 = vld [vmem:[%s5 + $0x38] sm:$0xff]
  %v2224 = vld [vmem:[%s5 + $0x40] sm:$0xff]
  %v2225 = vld [vmem:[%s5 + $0x48] sm:$0xff]
  %v2226 = vld [vmem:[%s6] sm:$0x1]
  %v2227 = vld [vmem:[%s11] sm:$0xf]
  %v2228 = vld [vmem:[%s12] sm:$0xf]
  %v2231 = vrot.slane %v1953, 1
  %v2232 = vrot.slane %v1954, 1
  %v2233 = vsel %vm108, %v2231, %v2232
  %2234 = vrot.lane.b32.xlu0 %v2233, 16
  %v2235 = vpop.permute.xlu0 %2234
  %v2237 = vrot.slane %v1953, 2
  %v2238 = vrot.slane %v1954, 2
  %v2239 = vsel %vm150, %v2237, %v2238
  %2240 = vrot.lane.b32.xlu0 %v2239, 32
  %v2241 = vpop.permute.xlu0 %2240
  %v2243 = vrot.slane %v1953, 3
  %v2244 = vrot.slane %v1954, 3
  %v2245 = vsel %vm192, %v2243, %v2244
  %2246 = vrot.lane.b32.xlu0 %v2245, 48
  %v2247 = vpop.permute.xlu0 %2246
  %v2249 = vrot.slane %v1953, 4
  %v2250 = vrot.slane %v1954, 4
  %v2251 = vsel %vm234, %v2249, %v2250
  %2252 = vrot.lane.b32.xlu0 %v2251, 64
  %v2253 = vpop.permute.xlu0 %2252
  %v2255 = vsel %vm636, %v1953, %v2235
  %v2256 = vsel %vm672, %v2255, %v2241
  %v2257 = vsel %vm708, %v2256, %v2247
  %v2258 = vsel %vm747, %v2257, %v2253
  %v2260 = vperm.slane %v2226, 0
  %vm2262 = vcmask 654336
  %v2264 = vsel %vm2262, %v2258, 0
  %2266 = vmatpush.msra.mxu0 0.0
  %2267 = vmatpush.msra.mxu0 0.0
  %2268 = vmatpush.msra.mxu0 0.0
  %2269 = vmatpush.msra.mxu0 0.0
  %2270 = vmatpush.msra.mxu0 0.0
  %2271 = vmatpush.msra.mxu0 0.0
  %2272 = vmatpush.msra.mxu0 %v2225
  %2273 = vmatpush.msra.mxu0 %v2224
  %2274 = vmatpush.msra.mxu0 %v2223
  %2275 = vmatpush.msra.mxu0 %v2222
  %2276 = vmatpush.msra.mxu0 %v2221
  %2277 = vmatpush.msra.mxu0 %v2220
  %2278 = vmatpush.msra.mxu0 %v2219
  %2279 = vmatpush.msra.mxu0 %v2218
  %2280 = vmatpush.msra.mxu0 %v2217
  %2281 = vmatpush.msra.mxu0 %v2216
  %2282 = vmatmul.f32.gmra.mxu0 %v2264
  %v2283 = vpop.f32.mrf.mxu0
  %v2284 = vadd.f32 %v2260, %v2283
  %2285 = vdwg.mxu0
  %v2286 = vmax.f32 %v2284, 0.0
  %v2288 = vsel %vm618, %v2227, 0
  %2290 = vmatpush.msra.mxu0 0.0
  %2291 = vmatpush.msra.mxu0 0.0
  %2292 = vmatpush.msra.mxu0 0.0
  %2293 = vmatpush.msra.mxu0 0.0
  %2294 = vmatpush.msra.mxu0 0.0
  %2295 = vmatpush.msra.mxu0 0.0
  %2296 = vmatpush.msra.mxu0 0.0
  %2297 = vmatpush.msra.mxu0 0.0
  %2298 = vmatpush.msra.mxu0 0.0
  %2299 = vmatpush.msra.mxu0 0.0
  %2300 = vmatpush.msra.mxu0 0.0
  %2301 = vmatpush.msra.mxu0 0.0
  %2302 = vmatpush.msra.mxu0 0.0
  %2303 = vmatpush.msra.mxu0 0.0
  %2304 = vmatpush.msra.mxu0 0.0
  %2305 = vmatpush.msra.mxu0 %v2286
  %2306 = vmatmul.f32.gmra.mxu0 %v2288
  %v2307 = vpop.f32.mrf.mxu0
  %v2308 = vadd.f32 0.0, %v2307
  %2309 = vdwg.mxu0
  %v2311 = vsel %vm618, %v2228, 0
  %2313 = vmatpush.msra.mxu0 0.0
  %2314 = vmatpush.msra.mxu0 0.0
  %2315 = vmatpush.msra.mxu0 0.0
  %2316 = vmatpush.msra.mxu0 0.0
  %2317 = vmatpush.msra.mxu0 0.0
  %2318 = vmatpush.msra.mxu0 0.0
  %2319 = vmatpush.msra.mxu0 0.0
  %2320 = vmatpush.msra.mxu0 0.0
  %2321 = vmatpush.msra.mxu0 0.0
  %2322 = vmatpush.msra.mxu0 0.0
  %2323 = vmatpush.msra.mxu0 0.0
  %2324 = vmatpush.msra.mxu0 0.0
  %2325 = vmatpush.msra.mxu0 0.0
  %2326 = vmatpush.msra.mxu0 0.0
  %2327 = vmatpush.msra.mxu0 0.0
  %2328 = vmatpush.msra.mxu0 %v2286
  %2329 = vmatmul.f32.gmra.mxu0 %v2311
  %v2330 = vpop.f32.mrf.mxu0
  %v2331 = vadd.f32 0.0, %v2330
  %2332 = vdwg.mxu0
  %v2333 = vmax.f32 %v2308, %v2331
  %v2336 = vrot.slane %v2214, 1
  %v2337 = vrot.slane %v2215, 1
  %v2338 = vsel %vm108, %v2336, %v2337
  %2339 = vrot.lane.b32.xlu0 %v2338, 16
  %v2340 = vpop.permute.xlu0 %2339
  %v2342 = vrot.slane %v2214, 2
  %v2343 = vrot.slane %v2215, 2
  %v2344 = vsel %vm150, %v2342, %v2343
  %2345 = vrot.lane.b32.xlu0 %v2344, 32
  %v2346 = vpop.permute.xlu0 %2345
  %v2348 = vrot.slane %v2214, 3
  %v2349 = vrot.slane %v2215, 3
  %v2350 = vsel %vm192, %v2348, %v2349
  %2351 = vrot.lane.b32.xlu0 %v2350, 48
  %v2352 = vpop.permute.xlu0 %2351
  %v2354 = vrot.slane %v2214, 4
  %v2355 = vrot.slane %v2215, 4
  %v2356 = vsel %vm234, %v2354, %v2355
  %2357 = vrot.lane.b32.xlu0 %v2356, 64
  %v2358 = vpop.permute.xlu0 %2357
  %v2360 = vsel %vm636, %v2214, %v2340
  %v2361 = vsel %vm672, %v2360, %v2346
  %v2362 = vsel %vm708, %v2361, %v2352
  %v2363 = vsel %vm747, %v2362, %v2358
  %v2365 = vsel %vm2262, %v2363, 0
  %2367 = vmatpush.msra.mxu0 0.0
  %2368 = vmatpush.msra.mxu0 0.0
  %2369 = vmatpush.msra.mxu0 0.0
  %2370 = vmatpush.msra.mxu0 0.0
  %2371 = vmatpush.msra.mxu0 0.0
  %2372 = vmatpush.msra.mxu0 0.0
  %2373 = vmatpush.msra.mxu0 %v2225
  %2374 = vmatpush.msra.mxu0 %v2224
  %2375 = vmatpush.msra.mxu0 %v2223
  %2376 = vmatpush.msra.mxu0 %v2222
  %2377 = vmatpush.msra.mxu0 %v2221
  %2378 = vmatpush.msra.mxu0 %v2220
  %2379 = vmatpush.msra.mxu0 %v2219
  %2380 = vmatpush.msra.mxu0 %v2218
  %2381 = vmatpush.msra.mxu0 %v2217
  %2382 = vmatpush.msra.mxu0 %v2216
  %2383 = vmatmul.f32.gmra.mxu0 %v2365
  %v2384 = vpop.f32.mrf.mxu0
  %v2385 = vadd.f32 %v2260, %v2384
  %2386 = vdwg.mxu0
  %v2387 = vmax.f32 %v2385, 0.0
  %2388 = vmatpush.msra.mxu0 0.0
  %2389 = vmatpush.msra.mxu0 0.0
  %2390 = vmatpush.msra.mxu0 0.0
  %2391 = vmatpush.msra.mxu0 0.0
  %2392 = vmatpush.msra.mxu0 0.0
  %2393 = vmatpush.msra.mxu0 0.0
  %2394 = vmatpush.msra.mxu0 0.0
  %2395 = vmatpush.msra.mxu0 0.0
  %2396 = vmatpush.msra.mxu0 0.0
  %2397 = vmatpush.msra.mxu0 0.0
  %2398 = vmatpush.msra.mxu0 0.0
  %2399 = vmatpush.msra.mxu0 0.0
  %2400 = vmatpush.msra.mxu0 0.0
  %2401 = vmatpush.msra.mxu0 0.0
  %2402 = vmatpush.msra.mxu0 0.0
  %2403 = vmatpush.msra.mxu0 %v2387
  %2404 = vmatmul.f32.gmra.mxu0 %v2288
  %v2405 = vpop.f32.mrf.mxu0
  %v2406 = vadd.f32 0.0, %v2405
  %2407 = vdwg.mxu0
  %2408 = vmatpush.msra.mxu0 0.0
  %2409 = vmatpush.msra.mxu0 0.0
  %2410 = vmatpush.msra.mxu0 0.0
  %2411 = vmatpush.msra.mxu0 0.0
  %2412 = vmatpush.msra.mxu0 0.0
  %2413 = vmatpush.msra.mxu0 0.0
  %2414 = vmatpush.msra.mxu0 0.0
  %2415 = vmatpush.msra.mxu0 0.0
  %2416 = vmatpush.msra.mxu0 0.0
  %2417 = vmatpush.msra.mxu0 0.0
  %2418 = vmatpush.msra.mxu0 0.0
  %2419 = vmatpush.msra.mxu0 0.0
  %2420 = vmatpush.msra.mxu0 0.0
  %2421 = vmatpush.msra.mxu0 0.0
  %2422 = vmatpush.msra.mxu0 0.0
  %2423 = vmatpush.msra.mxu0 %v2387
  %2424 = vmatmul.f32.gmra.mxu0 %v2311
  %v2425 = vpop.f32.mrf.mxu0
  %v2426 = vadd.f32 0.0, %v2425
  %2427 = vdwg.mxu0
  %v2428 = vmax.f32 %v2406, %v2426
  %v2430 = vrot.slane %v2333, 1
  %2431 = vrot.lane.b32.xlu0 %v2430, 32
  %v2432 = vpop.permute.xlu0 %2431
  %v2434 = vrot.slane %v2333, 2
  %2435 = vrot.lane.b32.xlu0 %v2434, 64
  %v2436 = vpop.permute.xlu0 %2435
  %v2438 = vrot.slane %v2333, 3
  %2439 = vrot.lane.b32.xlu0 %v2438, 96
  %v2440 = vpop.permute.xlu0 %2439
  %v2442 = vsel %vm672, %v2333, %v2432
  %v2443 = vsel %vm747, %v2442, %v2436
  %vm2444 = vcmask 785408
  %v2445 = vsel %vm2444, %v2443, %v2440
  %v2447 = vrot.slane %v2428, 1
  %2448 = vrot.lane.b32.xlu0 %v2447, 32
  %v2449 = vpop.permute.xlu0 %2448
  %v2451 = vrot.slane %v2428, 2
  %2452 = vrot.lane.b32.xlu0 %v2451, 64
  %v2453 = vpop.permute.xlu0 %2452
  %v2455 = vrot.slane %v2428, 3
  %2456 = vrot.lane.b32.xlu0 %v2455, 96
  %v2457 = vpop.permute.xlu0 %2456
  %v2459 = vsel %vm672, %v2428, %v2449
  %v2460 = vsel %vm747, %v2459, %v2453
  %v2461 = vsel %vm2444, %v2460, %v2457
  %v2463 = vrot.slane %v2461, 7
  %v2465 = vsel %vm360, %v2445, %v2463
  %v2466 = vld [vmem:[%s13] sm:$0xff]
  %v2467 = vld [vmem:[%s13 + $0x8] sm:$0xff]
  %v2468 = vld [vmem:[%s13 + $0x10] sm:$0xff]
  %v2469 = vld [vmem:[%s13 + $0x18] sm:$0xff]
  %v2470 = vld [vmem:[%s13 + $0x20] sm:$0xff]
  %v2471 = vld [vmem:[%s13 + $0x28] sm:$0xff]
  %v2472 = vld [vmem:[%s13 + $0x30] sm:$0xff]
  %v2473 = vld [vmem:[%s13 + $0x38] sm:$0xff]
  %v2474 = vld [vmem:[%s13 + $0x40] sm:$0xff]
  %v2475 = vld [vmem:[%s13 + $0x48] sm:$0xff]
  %v2476 = vld [vmem:[%s13 + $0x50] sm:$0xff]
  %v2477 = vld [vmem:[%s13 + $0x58] sm:$0xff]
  %v2478 = vld [vmem:[%s13 + $0x60] sm:$0xff]
  %v2479 = vld [vmem:[%s13 + $0x68] sm:$0xff]
  %v2480 = vld [vmem:[%s13 + $0x70] sm:$0xff]
  %v2481 = vld [vmem:[%s13 + $0x78] sm:$0xff]
  %v2482 = vld [vmem:[%s13 + $0x80] sm:$0xff]
  %v2483 = vld [vmem:[%s13 + $0x88] sm:$0xff]
  %v2484 = vld [vmem:[%s13 + $0x90] sm:$0xff]
  %v2485 = vld [vmem:[%s13 + $0x98] sm:$0xff]
  %v2486 = vld [vmem:[%s13 + $0xa0] sm:$0xff]
  %v2487 = vld [vmem:[%s13 + $0xa8] sm:$0xff]
  %v2488 = vld [vmem:[%s13 + $0xb0] sm:$0xff]
  %v2489 = vld [vmem:[%s13 + $0xb8] sm:$0xff]
  %v2490 = vld [vmem:[%s13 + $0xc0] sm:$0xff]
  %v2491 = vld [vmem:[%s13 + $0xc8] sm:$0xff]
  %v2492 = vld [vmem:[%s13 + $0xd0] sm:$0xff]
  %v2493 = vld [vmem:[%s13 + $0xd8] sm:$0xff]
  %v2494 = vld [vmem:[%s13 + $0xe0] sm:$0xff]
  %v2495 = vld [vmem:[%s13 + $0xe8] sm:$0xff]
  %v2496 = vld [vmem:[%s13 + $0xf0] sm:$0xff]
  %v2497 = vld [vmem:[%s13 + $0xf8] sm:$0xff]
  %v2498 = vld [vmem:[%s14] sm:$0x3]
  %v2500 = vperm.slane %v2498, 0
  %v2501 = vperm.slane %v2498, 1
  %2504 = vmatpush.msra.mxu0 %v2496
  %2505 = vmatpush.msra.mxu0 %v2494
  %2506 = vmatpush.msra.mxu0 %v2492
  %2507 = vmatpush.msra.mxu0 %v2490
  %2508 = vmatpush.msra.mxu0 %v2488
  %2509 = vmatpush.msra.mxu0 %v2486
  %2510 = vmatpush.msra.mxu0 %v2484
  %2511 = vmatpush.msra.mxu0 %v2482
  %2512 = vmatpush.msra.mxu0 %v2480
  %2513 = vmatpush.msra.mxu0 %v2478
  %2514 = vmatpush.msra.mxu0 %v2476
  %2515 = vmatpush.msra.mxu0 %v2474
  %2516 = vmatpush.msra.mxu0 %v2472
  %2517 = vmatpush.msra.mxu0 %v2470
  %2518 = vmatpush.msra.mxu0 %v2468
  %2519 = vmatpush.msra.mxu0 %v2466
  %2520 = vmatmul.f32.gmra.mxu0 %v2465
  %v2521 = vpop.f32.mrf.mxu0
  %v2522 = vadd.f32 %v2500, %v2521
  %2523 = vdwg.mxu0
  %2524 = vmatpush.msra.mxu0 %v2497
  %2525 = vmatpush.msra.mxu0 %v2495
  %2526 = vmatpush.msra.mxu0 %v2493
  %2527 = vmatpush.msra.mxu0 %v2491
  %2528 = vmatpush.msra.mxu0 %v2489
  %2529 = vmatpush.msra.mxu0 %v2487
  %2530 = vmatpush.msra.mxu0 %v2485
  %2531 = vmatpush.msra.mxu0 %v2483
  %2532 = vmatpush.msra.mxu0 %v2481
  %2533 = vmatpush.msra.mxu0 %v2479
  %2534 = vmatpush.msra.mxu0 %v2477
  %2535 = vmatpush.msra.mxu0 %v2475
  %2536 = vmatpush.msra.mxu0 %v2473
  %2537 = vmatpush.msra.mxu0 %v2471
  %2538 = vmatpush.msra.mxu0 %v2469
  %2539 = vmatpush.msra.mxu0 %v2467
  %2540 = vmatmul.f32.gmra.mxu0 %v2465
  %v2541 = vpop.f32.mrf.mxu0
  %v2542 = vadd.f32 %v2501, %v2541
  %2543 = vdwg.mxu0
  %v2544 = vmax.f32 %v2522, 0.0
  %v2545 = vmax.f32 %v2542, 0.0
  %v2546 = vld [vmem:[%s15] sm:$0xff]
  %v2547 = vld [vmem:[%s15 + $0x8] sm:$0xff]
  %v2548 = vld [vmem:[%s15 + $0x10] sm:$0xff]
  %v2549 = vld [vmem:[%s15 + $0x18] sm:$0xff]
  %v2550 = vld [vmem:[%s15 + $0x20] sm:$0xff]
  %v2551 = vld [vmem:[%s15 + $0x28] sm:$0xff]
  %v2552 = vld [vmem:[%s15 + $0x30] sm:$0xff]
  %v2553 = vld [vmem:[%s15 + $0x38] sm:$0xff]
  %v2554 = vld [vmem:[%s15 + $0x40] sm:$0xff]
  %v2555 = vld [vmem:[%s15 + $0x48] sm:$0xff]
  %v2556 = vld [vmem:[%s15 + $0x50] sm:$0xff]
  %v2557 = vld [vmem:[%s15 + $0x58] sm:$0xff]
  %v2558 = vld [vmem:[%s15 + $0x60] sm:$0xff]
  %v2559 = vld [vmem:[%s15 + $0x68] sm:$0xff]
  %v2560 = vld [vmem:[%s15 + $0x70] sm:$0xff]
  %v2561 = vld [vmem:[%s15 + $0x78] sm:$0xff]
  %v2562 = vld [vmem:[%s15 + $0x80] sm:$0xff]
  %v2563 = vld [vmem:[%s15 + $0x88] sm:$0xff]
  %v2564 = vld [vmem:[%s15 + $0x90] sm:$0xff]
  %v2565 = vld [vmem:[%s15 + $0x98] sm:$0xff]
  %v2566 = vld [vmem:[%s15 + $0xa0] sm:$0xff]
  %v2567 = vld [vmem:[%s15 + $0xa8] sm:$0xff]
  %v2568 = vld [vmem:[%s15 + $0xb0] sm:$0xff]
  %v2569 = vld [vmem:[%s15 + $0xb8] sm:$0xff]
  %v2570 = vld [vmem:[%s15 + $0xc0] sm:$0xff]
  %v2571 = vld [vmem:[%s15 + $0xc8] sm:$0xff]
  %v2572 = vld [vmem:[%s15 + $0xd0] sm:$0xff]
  %v2573 = vld [vmem:[%s15 + $0xd8] sm:$0xff]
  %v2574 = vld [vmem:[%s15 + $0xe0] sm:$0xff]
  %v2575 = vld [vmem:[%s15 + $0xe8] sm:$0xff]
  %v2576 = vld [vmem:[%s15 + $0xf0] sm:$0xff]
  %v2577 = vld [vmem:[%s15 + $0xf8] sm:$0xff]
  %v2578 = vld [vmem:[%s15 + $0x100] sm:$0xff]
  %v2579 = vld [vmem:[%s15 + $0x108] sm:$0xff]
  %v2580 = vld [vmem:[%s15 + $0x110] sm:$0xff]
  %v2581 = vld [vmem:[%s15 + $0x118] sm:$0xff]
  %v2582 = vld [vmem:[%s15 + $0x120] sm:$0xff]
  %v2583 = vld [vmem:[%s15 + $0x128] sm:$0xff]
  %v2584 = vld [vmem:[%s15 + $0x130] sm:$0xff]
  %v2585 = vld [vmem:[%s15 + $0x138] sm:$0xff]
  %v2586 = vld [vmem:[%s15 + $0x140] sm:$0xff]
  %v2587 = vld [vmem:[%s15 + $0x148] sm:$0xff]
  %v2588 = vld [vmem:[%s15 + $0x150] sm:$0xff]
  %v2589 = vld [vmem:[%s15 + $0x158] sm:$0xff]
  %v2590 = vld [vmem:[%s15 + $0x160] sm:$0xff]
  %v2591 = vld [vmem:[%s15 + $0x168] sm:$0xff]
  %v2592 = vld [vmem:[%s15 + $0x170] sm:$0xff]
  %v2593 = vld [vmem:[%s15 + $0x178] sm:$0xff]
  %v2594 = vld [vmem:[%s16] sm:$0x3]
  %v2596 = vperm.slane %v2594, 0
  %v2597 = vperm.slane %v2594, 1
  %v2601 = vsel %vm747, %v2545, 0
  %2603 = vmatpush.msra.mxu0 %v2576
  %2604 = vmatpush.msra.mxu0 %v2574
  %2605 = vmatpush.msra.mxu0 %v2572
  %2606 = vmatpush.msra.mxu0 %v2570
  %2607 = vmatpush.msra.mxu0 %v2568
  %2608 = vmatpush.msra.mxu0 %v2566
  %2609 = vmatpush.msra.mxu0 %v2564
  %2610 = vmatpush.msra.mxu0 %v2562
  %2611 = vmatpush.msra.mxu0 %v2560
  %2612 = vmatpush.msra.mxu0 %v2558
  %2613 = vmatpush.msra.mxu0 %v2556
  %2614 = vmatpush.msra.mxu0 %v2554
  %2615 = vmatpush.msra.mxu0 %v2552
  %2616 = vmatpush.msra.mxu0 %v2550
  %2617 = vmatpush.msra.mxu0 %v2548
  %2618 = vmatpush.msra.mxu0 %v2546
  %2619 = vmatmul.f32.gmra.mxu0 %v2544
  %v2620 = vpop.f32.mrf.mxu0
  %v2621 = vadd.f32 %v2596, %v2620
  %2622 = vdwg.mxu0
  %2623 = vmatpush.msra.mxu0 0.0
  %2624 = vmatpush.msra.mxu0 0.0
  %2625 = vmatpush.msra.mxu0 0.0
  %2626 = vmatpush.msra.mxu0 0.0
  %2627 = vmatpush.msra.mxu0 0.0
  %2628 = vmatpush.msra.mxu0 0.0
  %2629 = vmatpush.msra.mxu0 0.0
  %2630 = vmatpush.msra.mxu0 0.0
  %2631 = vmatpush.msra.mxu0 %v2592
  %2632 = vmatpush.msra.mxu0 %v2590
  %2633 = vmatpush.msra.mxu0 %v2588
  %2634 = vmatpush.msra.mxu0 %v2586
  %2635 = vmatpush.msra.mxu0 %v2584
  %2636 = vmatpush.msra.mxu0 %v2582
  %2637 = vmatpush.msra.mxu0 %v2580
  %2638 = vmatpush.msra.mxu0 %v2578
  %2639 = vmatmul.f32.gmra.mxu0 %v2601
  %v2640 = vpop.f32.mrf.mxu0
  %v2641 = vadd.f32 %v2621, %v2640
  %2642 = vdwg.mxu0
  %2643 = vmatpush.msra.mxu0 %v2577
  %2644 = vmatpush.msra.mxu0 %v2575
  %2645 = vmatpush.msra.mxu0 %v2573
  %2646 = vmatpush.msra.mxu0 %v2571
  %2647 = vmatpush.msra.mxu0 %v2569
  %2648 = vmatpush.msra.mxu0 %v2567
  %2649 = vmatpush.msra.mxu0 %v2565
  %2650 = vmatpush.msra.mxu0 %v2563
  %2651 = vmatpush.msra.mxu0 %v2561
  %2652 = vmatpush.msra.mxu0 %v2559
  %2653 = vmatpush.msra.mxu0 %v2557
  %2654 = vmatpush.msra.mxu0 %v2555
  %2655 = vmatpush.msra.mxu0 %v2553
  %2656 = vmatpush.msra.mxu0 %v2551
  %2657 = vmatpush.msra.mxu0 %v2549
  %2658 = vmatpush.msra.mxu0 %v2547
  %2659 = vmatmul.f32.gmra.mxu0 %v2544
  %v2660 = vpop.f32.mrf.mxu0
  %v2661 = vadd.f32 %v2597, %v2660
  %2662 = vdwg.mxu0
  %2663 = vmatpush.msra.mxu0 0.0
  %2664 = vmatpush.msra.mxu0 0.0
  %2665 = vmatpush.msra.mxu0 0.0
  %2666 = vmatpush.msra.mxu0 0.0
  %2667 = vmatpush.msra.mxu0 0.0
  %2668 = vmatpush.msra.mxu0 0.0
  %2669 = vmatpush.msra.mxu0 0.0
  %2670 = vmatpush.msra.mxu0 0.0
  %2671 = vmatpush.msra.mxu0 %v2593
  %2672 = vmatpush.msra.mxu0 %v2591
  %2673 = vmatpush.msra.mxu0 %v2589
  %2674 = vmatpush.msra.mxu0 %v2587
  %2675 = vmatpush.msra.mxu0 %v2585
  %2676 = vmatpush.msra.mxu0 %v2583
  %2677 = vmatpush.msra.mxu0 %v2581
  %2678 = vmatpush.msra.mxu0 %v2579
  %2679 = vmatmul.f32.gmra.mxu0 %v2601
  %v2680 = vpop.f32.mrf.mxu0
  %v2681 = vadd.f32 %v2661, %v2680
  %2682 = vdwg.mxu0
  %v2683 = vmax.f32 %v2641, 0.0
  %v2684 = vmax.f32 %v2681, 0.0
  %v2685 = vld [vmem:[%s17] sm:$0xff]
  %v2686 = vld [vmem:[%s17 + $0x8] sm:$0xff]
  %v2687 = vld [vmem:[%s17 + $0x10] sm:$0xff]
  %v2688 = vld [vmem:[%s17 + $0x18] sm:$0xff]
  %v2689 = vld [vmem:[%s17 + $0x20] sm:$0xff]
  %v2690 = vld [vmem:[%s17 + $0x28] sm:$0xff]
  %v2691 = vld [vmem:[%s17 + $0x30] sm:$0xff]
  %v2692 = vld [vmem:[%s17 + $0x38] sm:$0xff]
  %v2693 = vld [vmem:[%s17 + $0x40] sm:$0xff]
  %v2694 = vld [vmem:[%s17 + $0x48] sm:$0xff]
  %v2695 = vld [vmem:[%s17 + $0x50] sm:$0xff]
  %v2696 = vld [vmem:[%s17 + $0x58] sm:$0xff]
  %v2697 = vld [vmem:[%s17 + $0x60] sm:$0xff]
  %v2698 = vld [vmem:[%s17 + $0x68] sm:$0xff]
  %v2699 = vld [vmem:[%s17 + $0x70] sm:$0xff]
  %v2700 = vld [vmem:[%s17 + $0x78] sm:$0xff]
  %v2701 = vld [vmem:[%s17 + $0x80] sm:$0xff]
  %v2702 = vld [vmem:[%s17 + $0x88] sm:$0xff]
  %v2703 = vld [vmem:[%s17 + $0x90] sm:$0xff]
  %v2704 = vld [vmem:[%s17 + $0x98] sm:$0xff]
  %v2705 = vld [vmem:[%s17 + $0xa0] sm:$0xff]
  %v2706 = vld [vmem:[%s17 + $0xa8] sm:$0xff]
  %v2707 = vld [vmem:[%s17 + $0xb0] sm:$0xff]
  %v2708 = vld [vmem:[%s17 + $0xb8] sm:$0xff]
  %v2709 = vld [vmem:[%s18] sm:$0x1]
  %v2711 = vperm.slane %v2709, 0
  %v2714 = vsel %vm747, %v2684, 0
  %2716 = vmatpush.msra.mxu0 %v2700
  %2717 = vmatpush.msra.mxu0 %v2699
  %2718 = vmatpush.msra.mxu0 %v2698
  %2719 = vmatpush.msra.mxu0 %v2697
  %2720 = vmatpush.msra.mxu0 %v2696
  %2721 = vmatpush.msra.mxu0 %v2695
  %2722 = vmatpush.msra.mxu0 %v2694
  %2723 = vmatpush.msra.mxu0 %v2693
  %2724 = vmatpush.msra.mxu0 %v2692
  %2725 = vmatpush.msra.mxu0 %v2691
  %2726 = vmatpush.msra.mxu0 %v2690
  %2727 = vmatpush.msra.mxu0 %v2689
  %2728 = vmatpush.msra.mxu0 %v2688
  %2729 = vmatpush.msra.mxu0 %v2687
  %2730 = vmatpush.msra.mxu0 %v2686
  %2731 = vmatpush.msra.mxu0 %v2685
  %2732 = vmatmul.f32.gmra.mxu0 %v2683
  %v2733 = vpop.f32.mrf.mxu0
  %v2734 = vadd.f32 %v2711, %v2733
  %2735 = vdwg.mxu0
  %2736 = vmatpush.msra.mxu0 0.0
  %2737 = vmatpush.msra.mxu0 0.0
  %2738 = vmatpush.msra.mxu0 0.0
  %2739 = vmatpush.msra.mxu0 0.0
  %2740 = vmatpush.msra.mxu0 0.0
  %2741 = vmatpush.msra.mxu0 0.0
  %2742 = vmatpush.msra.mxu0 0.0
  %2743 = vmatpush.msra.mxu0 0.0
  %2744 = vmatpush.msra.mxu0 %v2708
  %2745 = vmatpush.msra.mxu0 %v2707
  %2746 = vmatpush.msra.mxu0 %v2706
  %2747 = vmatpush.msra.mxu0 %v2705
  %2748 = vmatpush.msra.mxu0 %v2704
  %2749 = vmatpush.msra.mxu0 %v2703
  %2750 = vmatpush.msra.mxu0 %v2702
  %2751 = vmatpush.msra.mxu0 %v2701
  %2752 = vmatmul.f32.gmra.mxu0 %v2714
  %v2753 = vpop.f32.mrf.mxu0
  %v2754 = vadd.f32 %v2734, %v2753
  %2755 = vdwg.mxu0
  %vm2756 = vcmask 41984
  %2757 = vst.msk [vmem:[%s19] sm:$0x3] %vm2756, %v2754
  // Predicated region
  $region78: #{flow_reg_clf_forward.1} parent=0 // pred_check
    _
  $region79: #{flow_reg_clf_forward.1} parent=0 // pred_check_branch
    %2759 = sbr.rel (0) target = $region81
  $region80: #{flow_reg_clf_forward.1} parent=0 // pred_region
    _
  $region81: #{flow_reg_clf_forward.1} parent=0 // pred_fallthru
    _
  // Predicated region
  $region82: #{flow_reg_clf_forward.1} parent=0 // pred_check
    _
  $region83: #{flow_reg_clf_forward.1} parent=0 // pred_check_branch
    %2761 = sbr.rel (0) target = $region85
  $region84: #{flow_reg_clf_forward.1} parent=0 // pred_region
    _
  $region85: #{flow_reg_clf_forward.1} parent=0 // pred_fallthru
    _

</llo_original>
